<compile_context>
chip_gen: v5e
topology: v5e:2x2
jax: 0.10.0
libtpu: 0.0.40
codegen_flags: <defaults>
</compile_context>

<pallas_src>
import functools

import jax
import jax.numpy as jnp
from jax.experimental import pallas as pl
from jax.experimental.pallas import tpu as pltpu

NEG_SLOPE = 0.01   # F.leaky_relu default negative_slope
H_ENC = 256        # encoder_hidden / l2 width (multiple of 128)
H_BOT = 128        # 64-wide bottleneck padded to one full lane group
_MIB = 1024 * 1024


def _round_up(x, m):
    return (x + m - 1) // m * m


def _leaky_relu_f32(v):
    # max(v, a*v) == leaky_relu(v) for 0 < a < 1: one max + one mul.
    return jnp.maximum(v, NEG_SLOPE * v)


def _device_kind():
    try:
        return jax.devices()[0].device_kind.lower()
    except Exception:
        return ""


# ---------------------------------------------------------------------------
# Kernels
# ---------------------------------------------------------------------------
def mlpae_fused_kernel(x_ref,
                       w_enc_ref, b_enc_ref,   # (D_pad, 256), (1, 256)
                       w_l1_ref, b_l1_ref,     # (256, 128),   (1, 128)
                       w_zm_ref, b_zm_ref,     # (128, L_pad), (1, L_pad)
                       w_zd_ref, b_zd_ref,     # (L_pad, 128), (1, 128)
                       w_l2_ref, b_l2_ref,     # (128, 256),   (1, 256)
                       w_dec_ref, b_dec_ref,   # (256, D_pad), (1, D_pad)
                       out_ref):               # (TN, D_pad) bf16
    """Whole encoder -> latent -> decoder chain for one batch tile."""
    bf16 = jnp.bfloat16
    h = jnp.dot(x_ref[...], w_enc_ref[...], preferred_element_type=jnp.float32)
    h = _leaky_relu_f32(h + b_enc_ref[...])
    h = jnp.dot(h.astype(bf16), w_l1_ref[...], preferred_element_type=jnp.float32)
    h = _leaky_relu_f32(h + b_l1_ref[...])
    z = jnp.dot(h.astype(bf16), w_zm_ref[...], preferred_element_type=jnp.float32)
    z = z + b_zm_ref[...]
    d = jnp.dot(z.astype(bf16), w_zd_ref[...], preferred_element_type=jnp.float32)
    d = _leaky_relu_f32(d + b_zd_ref[...])
    d = jnp.dot(d.astype(bf16), w_l2_ref[...], preferred_element_type=jnp.float32)
    d = _leaky_relu_f32(d + b_l2_ref[...])
    out = jnp.dot(d.astype(bf16), w_dec_ref[...], preferred_element_type=jnp.float32)
    out = out + b_dec_ref[...]
    # mode == 'continuous' -> no sigmoid.
    out_ref[...] = out.astype(out_ref.dtype)


def mlpae_coltiled_kernel(x_ref, w_enc_ref, b_enc_ref, w_l1_ref, b_l1_ref,
                          w_zm_ref, b_zm_ref, w_zd_ref, b_zd_ref,
                          w_l2_ref, b_l2_ref, w_dec_ref, b_dec_ref,
                          out_ref, d_scratch):
    """Fallback for very large D: decoder columns tiled over grid axis j.

    Encoder + bottleneck are computed once per batch tile (at j == 0) into a
    VMEM scratch; each j then writes one lane-dense (TN, TD) decoder slab.
    Only correct because axis 1 is the innermost, sequential ('arbitrary')
    axis — do not reorder the grid or mark it parallel.
    """
    bf16 = jnp.bfloat16

    @pl.when(pl.program_id(1) == 0)
    def _():
        h = jnp.dot(x_ref[...], w_enc_ref[...], preferred_element_type=jnp.float32)
        h = _leaky_relu_f32(h + b_enc_ref[...])
        h = jnp.dot(h.astype(bf16), w_l1_ref[...], preferred_element_type=jnp.float32)
        h = _leaky_relu_f32(h + b_l1_ref[...])
        z = jnp.dot(h.astype(bf16), w_zm_ref[...], preferred_element_type=jnp.float32)
        z = z + b_zm_ref[...]
        d = jnp.dot(z.astype(bf16), w_zd_ref[...], preferred_element_type=jnp.float32)
        d = _leaky_relu_f32(d + b_zd_ref[...])
        d = jnp.dot(d.astype(bf16), w_l2_ref[...], preferred_element_type=jnp.float32)
        d = _leaky_relu_f32(d + b_l2_ref[...])
        d_scratch[...] = d.astype(bf16)

    out = jnp.dot(d_scratch[...], w_dec_ref[...], preferred_element_type=jnp.float32)
    out_ref[...] = (out + b_dec_ref[...]).astype(out_ref.dtype)


# ---------------------------------------------------------------------------
# Parameters
# ---------------------------------------------------------------------------
def _init_linear(key, fan_in, fan_out, dtype=jnp.float32):
    """PyTorch nn.Linear-style uniform(-1/sqrt(fan_in), 1/sqrt(fan_in)).

    Returns W of shape (fan_in, fan_out) (already transposed) and b (1, fan_out).
    """
    kw, kb = jax.random.split(key)
    bound = 1.0 / jnp.sqrt(jnp.asarray(fan_in, dtype))
    w = jax.random.uniform(kw, (fan_in, fan_out), dtype, -bound, bound)
    b = jax.random.uniform(kb, (1, fan_out), dtype, -bound, bound)
    return w, b


def make_mlpae_params(key, n_channels, input_dim, latent_dim):
    D = n_channels * input_dim * input_dim
    keys = jax.random.split(key, 6)
    return {
        "enc": _init_linear(keys[0], D, 256),          # encoder_hidden
        "l1": _init_linear(keys[1], 256, 64),          # l1
        "zm": _init_linear(keys[2], 64, latent_dim),   # z_mean
        "zd": _init_linear(keys[3], latent_dim, 64),   # z_develop
        "l2": _init_linear(keys[4], 64, 256),          # l2
        "dec": _init_linear(keys[5], 256, D),          # decoder_hidden
    }


def prepare_mlpae_params(params):
    """Pad to lane-dense shapes and cast ONCE (hoisted out of the forward)."""
    D = params["enc"][0].shape[0]
    L = params["zm"][0].shape[1]
    D_pad = _round_up(D, 128)
    L_pad = _round_up(L, 128)
    bf16, f32 = jnp.bfloat16, jnp.float32

    def pad2(a, rows, cols):
        return jnp.pad(a, ((0, rows - a.shape[0]), (0, cols - a.shape[1])))

    return {
        "w_enc": pad2(params["enc"][0], D_pad, H_ENC).astype(bf16),
        "b_enc": pad2(params["enc"][1], 1, H_ENC).astype(f32),
        "w_l1": pad2(params["l1"][0], H_ENC, H_BOT).astype(bf16),
        "b_l1": pad2(params["l1"][1], 1, H_BOT).astype(f32),
        "w_zm": pad2(params["zm"][0], H_BOT, L_pad).astype(bf16),
        "b_zm": pad2(params["zm"][1], 1, L_pad).astype(f32),
        "w_zd": pad2(params["zd"][0], L_pad, H_BOT).astype(bf16),
        "b_zd": pad2(params["zd"][1], 1, H_BOT).astype(f32),
        "w_l2": pad2(params["l2"][0], H_BOT, H_ENC).astype(bf16),
        "b_l2": pad2(params["l2"][1], 1, H_ENC).astype(f32),
        "w_dec": pad2(params["dec"][0], H_ENC, D_pad).astype(bf16),
        "b_dec": pad2(params["dec"][1], 1, D_pad).astype(f32),
    }


# ---------------------------------------------------------------------------
# Forward
# ---------------------------------------------------------------------------
@functools.partial(jax.jit, static_argnames=("n_channels", "input_dim"))
def mlpae_forward(x_nchw, prepared, *, n_channels, input_dim):
    N = x_nchw.shape[0]
    D = n_channels * input_dim * input_dim
    D_pad = prepared["w_enc"].shape[0]
    L_pad = prepared["w_zm"].shape[1]
    assert prepared["w_dec"].shape[1] == D_pad

    kind = _device_kind()

    # --- batch tiling --------------------------------------------------------
    N_pad8 = _round_up(max(N, 8), 8)
    if N_pad8 < 128:
        TN = N_pad8
    else:
        # v6e/v7x have a 256-wide MXU -> 256-row tiles fill the M dimension;
        # v5e is 128-wide -> keep 128 (bigger TN only adds VMEM pressure).
        TN = 256 if ("v5" not in kind and N_pad8 >= 256) else 128
    N_pad = _round_up(N_pad8, TN)
    n_bt = N_pad // TN

    # --- decoder column tiling -----------------------------------------------
    # Collapse the column axis whenever the full decoder weight slab is small:
    # (256, D_pad) bf16 <= 4 MiB  <=>  D_pad <= 8192.  Then grid = (n_bt,),
    # no scratch, no pl.when, single wide unmasked output store.
    if H_ENC * D_pad * 2 <= 4 * _MIB:
        TD = D_pad
    else:
        TD = 128
        for cand in (2048, 1024, 512, 256, 128):
            if D_pad % cand == 0:
                TD = cand
                break
    n_dt = D_pad // TD

    # --- input prep: reshape -> bf16 -> pad (no padded f32 intermediate) -----
    x_p = jnp.pad(x_nchw.reshape(N, D).astype(jnp.bfloat16),
                  ((0, N_pad - N), (0, D_pad - D)))

    # --- advisory cost estimate ----------------------------------------------
    mm = (D_pad * H_ENC + H_ENC * H_BOT + H_BOT * L_pad
          + L_pad * H_BOT + H_BOT * H_ENC + H_ENC * D_pad)
    flops = 2 * N_pad * mm
    weight_bytes = 2 * mm
    bias_bytes = 4 * (2 * H_ENC + 2 * H_BOT + L_pad + D_pad)
    bytes_accessed = (N_pad * D_pad * 2      # x  (bf16)
                      + N_pad * D_pad * 2    # out (bf16)
                      + weight_bytes + bias_bytes)
    cost = pl.CostEstimate(flops=flops, transcendentals=0,
                           bytes_accessed=bytes_accessed)

    # --- VMEM budget (per-block bytes; auto-pipelining double-buffers) -------
    block_bytes = (TN * D_pad * 2            # x tile
                   + TN * TD * 2             # out tile
                   + (D_pad * H_ENC + H_ENC * H_BOT + H_BOT * L_pad
                      + L_pad * H_BOT + H_BOT * H_ENC + H_ENC * TD) * 2
                   + bias_bytes
                   + TN * H_ENC * 2)         # coltiled scratch (slack otherwise)
    vmem_cap = 48 * _MIB if "v7" in kind else 96 * _MIB
    vmem_limit = int(min(vmem_cap, max(32 * _MIB, 3 * block_bytes)))

    out_shape = jax.ShapeDtypeStruct((N_pad, D_pad), jnp.bfloat16)
    weights = (prepared["w_enc"], prepared["b_enc"],
               prepared["w_l1"], prepared["b_l1"],
               prepared["w_zm"], prepared["b_zm"],
               prepared["w_zd"], prepared["b_zd"],
               prepared["w_l2"], prepared["b_l2"],
               prepared["w_dec"], prepared["b_dec"])

    if n_dt == 1:
        # ------------------------ collapsed (common) path --------------------
        const = lambda i: (0, 0)
        in_specs = [
            pl.BlockSpec((TN, D_pad), lambda i: (i, 0)),      # x
            pl.BlockSpec((D_pad, H_ENC), const),              # w_enc
            pl.BlockSpec((1, H_ENC), const),                  # b_enc
            pl.BlockSpec((H_ENC, H_BOT), const),              # w_l1
            pl.BlockSpec((1, H_BOT), const),                  # b_l1
            pl.BlockSpec((H_BOT, L_pad), const),              # w_zm
            pl.BlockSpec((1, L_pad), const),                  # b_zm
            pl.BlockSpec((L_pad, H_BOT), const),              # w_zd
            pl.BlockSpec((1, H_BOT), const),                  # b_zd
            pl.BlockSpec((H_BOT, H_ENC), const),              # w_l2
            pl.BlockSpec((1, H_ENC), const),                  # b_l2
            pl.BlockSpec((H_ENC, D_pad), const),              # w_dec (full)
            pl.BlockSpec((1, D_pad), const),                  # b_dec (full)
        ]
        out_p = pl.pallas_call(
            mlpae_fused_kernel,
            out_shape=out_shape,
            grid=(n_bt,),
            in_specs=in_specs,
            out_specs=pl.BlockSpec((TN, D_pad), lambda i: (i, 0)),
            compiler_params=pltpu.CompilerParams(
                dimension_semantics=("parallel",),
                vmem_limit_bytes=vmem_limit),
            cost_estimate=cost,
        )(x_p, *weights)
    else:
        # ---------------------- large-D fallback path ------------------------
        # TODO(synk): for image-scale D on v7x (64 MiB VMEM) the fully
        # resident (D_pad, 256) encoder weight also needs a K-reduction grid
        # axis (f32 accumulator); not implemented here.
        const2 = lambda i, j: (0, 0)
        in_specs = [
            pl.BlockSpec((TN, D_pad), lambda i, j: (i, 0)),   # x (resident over j)
            pl.BlockSpec((D_pad, H_ENC), const2),             # w_enc
            pl.BlockSpec((1, H_ENC), const2),                 # b_enc
            pl.BlockSpec((H_ENC, H_BOT), const2),             # w_l1
            pl.BlockSpec((1, H_BOT), const2),                 # b_l1
            pl.BlockSpec((H_BOT, L_pad), const2),             # w_zm
            pl.BlockSpec((1, L_pad), const2),                 # b_zm
            pl.BlockSpec((L_pad, H_BOT), const2),             # w_zd
            pl.BlockSpec((1, H_BOT), const2),                 # b_zd
            pl.BlockSpec((H_BOT, H_ENC), const2),             # w_l2
            pl.BlockSpec((1, H_ENC), const2),                 # b_l2
            pl.BlockSpec((H_ENC, TD), lambda i, j: (0, j)),   # w_dec column tile
            pl.BlockSpec((1, TD), lambda i, j: (0, j)),       # b_dec column tile
        ]
        out_p = pl.pallas_call(
            mlpae_coltiled_kernel,
            out_shape=out_shape,
            grid=(n_bt, n_dt),
            in_specs=in_specs,
            out_specs=pl.BlockSpec((TN, TD), lambda i, j: (i, j)),
            scratch_shapes=[pltpu.VMEM((TN, H_ENC), jnp.bfloat16)],
            compiler_params=pltpu.CompilerParams(
                dimension_semantics=("parallel", "arbitrary"),
                vmem_limit_bytes=vmem_limit),
            cost_estimate=cost,
        )(x_p, *weights)

    # Drop padding, upcast once outside the kernel, reshape to NCHW
    # (== out.view(z.size(0), n_channels, input_dim, -1)).
    out = out_p[:N, :D].astype(x_nchw.dtype)
    return out.reshape(N, n_channels, input_dim, input_dim)


# ---------------------------------------------------------------------------
# Pure-JAX f32 reference
# ---------------------------------------------------------------------------
def mlpae_forward_ref(x_nchw, params):
    N = x_nchw.shape[0]
    x = x_nchw.reshape(N, -1).astype(jnp.float32)
    lk = lambda v: jnp.where(v > 0, v, NEG_SLOPE * v)
    h = lk(x @ params["enc"][0] + params["enc"][1])
    h = lk(h @ params["l1"][0] + params["l1"][1])
    z = h @ params["zm"][0] + params["zm"][1]
    d = lk(z @ params["zd"][0] + params["zd"][1])
    d = lk(d @ params["l2"][0] + params["l2"][1])
    out = d @ params["dec"][0] + params["dec"][1]
    return out.reshape(x_nchw.shape)


if __name__ == "__main__":
    # Small shapes consistent with the module: batch=2, channels=4, spatial=16.
    N, C, H = 2, 4, 16
    LATENT = 32

    key = jax.random.PRNGKey(0)
    k_x, k_p = jax.random.split(key)
    x = jax.random.normal(k_x, (N, C, H, H), dtype=jnp.float32)
    params = make_mlpae_params(k_p, n_channels=C, input_dim=H, latent_dim=LATENT)
    prepared = prepare_mlpae_params(params)   # pad + bf16 cast once, outside jit

    out = mlpae_forward(x, prepared, n_channels=C, input_dim=H)
    out = jax.block_until_ready(out)

    ref = mlpae_forward_ref(x, params)
    assert out.shape == (N, C, H, H), out.shape
    # bf16 weights/activations/output vs f32 reference -> loose tolerance.
    max_err = float(jnp.max(jnp.abs(out - ref)))
    assert jnp.allclose(out, ref, atol=5e-2, rtol=5e-2), max_err

    print("KERNEL_OK")
</pallas_src>

<mosaic_0001>
module attributes {stable_mosaic.version = 11 : i64} {
  func.func @mlpae_fused_kernel(%arg0: i32, %arg1: memref<8x1024xbf16, #tpu.memory_space<vmem>>, %arg2: memref<1024x256xbf16, #tpu.memory_space<vmem>>, %arg3: memref<1x256xf32, #tpu.memory_space<vmem>>, %arg4: memref<256x128xbf16, #tpu.memory_space<vmem>>, %arg5: memref<1x128xf32, #tpu.memory_space<vmem>>, %arg6: memref<128x128xbf16, #tpu.memory_space<vmem>>, %arg7: memref<1x128xf32, #tpu.memory_space<vmem>>, %arg8: memref<128x128xbf16, #tpu.memory_space<vmem>>, %arg9: memref<1x128xf32, #tpu.memory_space<vmem>>, %arg10: memref<128x256xbf16, #tpu.memory_space<vmem>>, %arg11: memref<1x256xf32, #tpu.memory_space<vmem>>, %arg12: memref<256x1024xbf16, #tpu.memory_space<vmem>>, %arg13: memref<1x1024xf32, #tpu.memory_space<vmem>>, %arg14: memref<8x1024xbf16, #tpu.memory_space<vmem>>) attributes {dimension_semantics = [#tpu.dimension_semantics<parallel>], iteration_bounds = array<i64: 1>, scalar_prefetch = 0 : i64, scratch_operands = 0 : i64, tpu.core_type = #tpu.core_type<tc>, window_params = [{transform_indices = @transform_0, window_bounds = array<i64: 8, 1024>}, {pipeline_mode = #tpu.pipeline_mode<synchronous>, transform_indices = @transform_1, window_bounds = array<i64: 1024, 256>}, {pipeline_mode = #tpu.pipeline_mode<synchronous>, transform_indices = @transform_2, window_bounds = array<i64: 1, 256>}, {pipeline_mode = #tpu.pipeline_mode<synchronous>, transform_indices = @transform_3, window_bounds = array<i64: 256, 128>}, {pipeline_mode = #tpu.pipeline_mode<synchronous>, transform_indices = @transform_4, window_bounds = array<i64: 1, 128>}, {pipeline_mode = #tpu.pipeline_mode<synchronous>, transform_indices = @transform_5, window_bounds = array<i64: 128, 128>}, {pipeline_mode = #tpu.pipeline_mode<synchronous>, transform_indices = @transform_6, window_bounds = array<i64: 1, 128>}, {pipeline_mode = #tpu.pipeline_mode<synchronous>, transform_indices = @transform_7, window_bounds = array<i64: 128, 128>}, {pipeline_mode = #tpu.pipeline_mode<synchronous>, transform_indices = @transform_8, window_bounds = array<i64: 1, 128>}, {pipeline_mode = #tpu.pipeline_mode<synchronous>, transform_indices = @transform_9, window_bounds = array<i64: 128, 256>}, {pipeline_mode = #tpu.pipeline_mode<synchronous>, transform_indices = @transform_10, window_bounds = array<i64: 1, 256>}, {pipeline_mode = #tpu.pipeline_mode<synchronous>, transform_indices = @transform_11, window_bounds = array<i64: 256, 1024>}, {pipeline_mode = #tpu.pipeline_mode<synchronous>, transform_indices = @transform_12, window_bounds = array<i64: 1, 1024>}, {transform_indices = @transform_13, window_bounds = array<i64: 8, 1024>}]} {
    %c0 = arith.constant 0 : index
    %c0_0 = arith.constant 0 : index
    %0 = vector.load %arg1[%c0, %c0_0] : memref<8x1024xbf16, #tpu.memory_space<vmem>>, vector<8x1024xbf16>
    %c0_1 = arith.constant 0 : index
    %c0_2 = arith.constant 0 : index
    %1 = vector.load %arg2[%c0_1, %c0_2] : memref<1024x256xbf16, #tpu.memory_space<vmem>>, vector<1024x256xbf16>
    %cst = arith.constant dense<0.000000e+00> : vector<8x256xf32>
    %2 = tpu.matmul %0, %1, %cst {dimension_numbers = #tpu.dot_dimension_numbers<[1], [0], [0], [1], [0, 0, 1, 1], [], []>} : vector<8x1024xbf16>, vector<1024x256xbf16>, vector<8x256xf32> -> vector<8x256xf32>
    %c0_3 = arith.constant 0 : index
    %c0_4 = arith.constant 0 : index
    %3 = vector.load %arg3[%c0_3, %c0_4] : memref<1x256xf32, #tpu.memory_space<vmem>>, vector<1x256xf32>
    %4 = vector.broadcast %3 : vector<1x256xf32> to vector<8x256xf32>
    %5 = arith.addf %2, %4 : vector<8x256xf32>
    %cst_5 = arith.constant 0.00999999977 : f32
    %6 = vector.broadcast %cst_5 : f32 to vector<8x256xf32>
    %7 = arith.mulf %6, %5 : vector<8x256xf32>
    %8 = arith.maximumf %5, %7 : vector<8x256xf32>
    %9 = arith.truncf %8 : vector<8x256xf32> to vector<8x256xbf16>
    %c0_6 = arith.constant 0 : index
    %c0_7 = arith.constant 0 : index
    %10 = vector.load %arg4[%c0_6, %c0_7] : memref<256x128xbf16, #tpu.memory_space<vmem>>, vector<256x128xbf16>
    %cst_8 = arith.constant dense<0.000000e+00> : vector<8x128xf32>
    %11 = tpu.matmul %9, %10, %cst_8 {dimension_numbers = #tpu.dot_dimension_numbers<[1], [0], [0], [1], [0, 0, 1, 1], [], []>} : vector<8x256xbf16>, vector<256x128xbf16>, vector<8x128xf32> -> vector<8x128xf32>
    %c0_9 = arith.constant 0 : index
    %c0_10 = arith.constant 0 : index
    %12 = vector.load %arg5[%c0_9, %c0_10] : memref<1x128xf32, #tpu.memory_space<vmem>>, vector<1x128xf32>
    %13 = vector.broadcast %12 : vector<1x128xf32> to vector<8x128xf32>
    %14 = arith.addf %11, %13 : vector<8x128xf32>
    %cst_11 = arith.constant 0.00999999977 : f32
    %15 = vector.broadcast %cst_11 : f32 to vector<8x128xf32>
    %16 = arith.mulf %15, %14 : vector<8x128xf32>
    %17 = arith.maximumf %14, %16 : vector<8x128xf32>
    %18 = arith.truncf %17 : vector<8x128xf32> to vector<8x128xbf16>
    %c0_12 = arith.constant 0 : index
    %c0_13 = arith.constant 0 : index
    %19 = vector.load %arg6[%c0_12, %c0_13] : memref<128x128xbf16, #tpu.memory_space<vmem>>, vector<128x128xbf16>
    %cst_14 = arith.constant dense<0.000000e+00> : vector<8x128xf32>
    %20 = tpu.matmul %18, %19, %cst_14 {dimension_numbers = #tpu.dot_dimension_numbers<[1], [0], [0], [1], [0, 0, 1, 1], [], []>} : vector<8x128xbf16>, vector<128x128xbf16>, vector<8x128xf32> -> vector<8x128xf32>
    %c0_15 = arith.constant 0 : index
    %c0_16 = arith.constant 0 : index
    %21 = vector.load %arg7[%c0_15, %c0_16] : memref<1x128xf32, #tpu.memory_space<vmem>>, vector<1x128xf32>
    %22 = vector.broadcast %21 : vector<1x128xf32> to vector<8x128xf32>
    %23 = arith.addf %20, %22 : vector<8x128xf32>
    %24 = arith.truncf %23 : vector<8x128xf32> to vector<8x128xbf16>
    %c0_17 = arith.constant 0 : index
    %c0_18 = arith.constant 0 : index
    %25 = vector.load %arg8[%c0_17, %c0_18] : memref<128x128xbf16, #tpu.memory_space<vmem>>, vector<128x128xbf16>
    %cst_19 = arith.constant dense<0.000000e+00> : vector<8x128xf32>
    %26 = tpu.matmul %24, %25, %cst_19 {dimension_numbers = #tpu.dot_dimension_numbers<[1], [0], [0], [1], [0, 0, 1, 1], [], []>} : vector<8x128xbf16>, vector<128x128xbf16>, vector<8x128xf32> -> vector<8x128xf32>
    %c0_20 = arith.constant 0 : index
    %c0_21 = arith.constant 0 : index
    %27 = vector.load %arg9[%c0_20, %c0_21] : memref<1x128xf32, #tpu.memory_space<vmem>>, vector<1x128xf32>
    %28 = vector.broadcast %27 : vector<1x128xf32> to vector<8x128xf32>
    %29 = arith.addf %26, %28 : vector<8x128xf32>
    %cst_22 = arith.constant 0.00999999977 : f32
    %30 = vector.broadcast %cst_22 : f32 to vector<8x128xf32>
    %31 = arith.mulf %30, %29 : vector<8x128xf32>
    %32 = arith.maximumf %29, %31 : vector<8x128xf32>
    %33 = arith.truncf %32 : vector<8x128xf32> to vector<8x128xbf16>
    %c0_23 = arith.constant 0 : index
    %c0_24 = arith.constant 0 : index
    %34 = vector.load %arg10[%c0_23, %c0_24] : memref<128x256xbf16, #tpu.memory_space<vmem>>, vector<128x256xbf16>
    %cst_25 = arith.constant dense<0.000000e+00> : vector<8x256xf32>
    %35 = tpu.matmul %33, %34, %cst_25 {dimension_numbers = #tpu.dot_dimension_numbers<[1], [0], [0], [1], [0, 0, 1, 1], [], []>} : vector<8x128xbf16>, vector<128x256xbf16>, vector<8x256xf32> -> vector<8x256xf32>
    %c0_26 = arith.constant 0 : index
    %c0_27 = arith.constant 0 : index
    %36 = vector.load %arg11[%c0_26, %c0_27] : memref<1x256xf32, #tpu.memory_space<vmem>>, vector<1x256xf32>
    %37 = vector.broadcast %36 : vector<1x256xf32> to vector<8x256xf32>
    %38 = arith.addf %35, %37 : vector<8x256xf32>
    %cst_28 = arith.constant 0.00999999977 : f32
    %39 = vector.broadcast %cst_28 : f32 to vector<8x256xf32>
    %40 = arith.mulf %39, %38 : vector<8x256xf32>
    %41 = arith.maximumf %38, %40 : vector<8x256xf32>
    %42 = arith.truncf %41 : vector<8x256xf32> to vector<8x256xbf16>
    %c0_29 = arith.constant 0 : index
    %c0_30 = arith.constant 0 : index
    %43 = vector.load %arg12[%c0_29, %c0_30] : memref<256x1024xbf16, #tpu.memory_space<vmem>>, vector<256x1024xbf16>
    %cst_31 = arith.constant dense<0.000000e+00> : vector<8x1024xf32>
    %44 = tpu.matmul %42, %43, %cst_31 {dimension_numbers = #tpu.dot_dimension_numbers<[1], [0], [0], [1], [0, 0, 1, 1], [], []>} : vector<8x256xbf16>, vector<256x1024xbf16>, vector<8x1024xf32> -> vector<8x1024xf32>
    %c0_32 = arith.constant 0 : index
    %c0_33 = arith.constant 0 : index
    %45 = vector.load %arg13[%c0_32, %c0_33] : memref<1x1024xf32, #tpu.memory_space<vmem>>, vector<1x1024xf32>
    %46 = vector.broadcast %45 : vector<1x1024xf32> to vector<8x1024xf32>
    %47 = arith.addf %44, %46 : vector<8x1024xf32>
    %48 = arith.truncf %47 : vector<8x1024xf32> to vector<8x1024xbf16>
    %c0_34 = arith.constant 0 : index
    %c0_35 = arith.constant 0 : index
    %49 = vector.load %arg14[%c0_34, %c0_35] : memref<8x1024xbf16, #tpu.memory_space<vmem>>, vector<8x1024xbf16>
    tpu.vector_store %arg14[%c0_34, %c0_35], %48 {strides = array<i32>} : memref<8x1024xbf16, #tpu.memory_space<vmem>>, vector<8x1024xbf16>,
    return
  }
  func.func @transform_0(%arg0: i32) -> (i32, i32) {
    %c0_i32 = arith.constant 0 : i32
    %c0_i32_0 = arith.constant 0 : i32
    return %arg0, %c0_i32 : i32, i32
  }
  func.func @transform_1(%arg0: i32) -> (i32, i32) {
    %c0_i32 = arith.constant 0 : i32
    %c0_i32_0 = arith.constant 0 : i32
    %c0_i32_1 = arith.constant 0 : i32
    return %c0_i32, %c0_i32_0 : i32, i32
  }
  func.func @transform_2(%arg0: i32) -> (i32, i32) {
    %c0_i32 = arith.constant 0 : i32
    %c0_i32_0 = arith.constant 0 : i32
    %c0_i32_1 = arith.constant 0 : i32
    return %c0_i32, %c0_i32_0 : i32, i32
  }
  func.func @transform_3(%arg0: i32) -> (i32, i32) {
    %c0_i32 = arith.constant 0 : i32
    %c0_i32_0 = arith.constant 0 : i32
    %c0_i32_1 = arith.constant 0 : i32
    return %c0_i32, %c0_i32_0 : i32, i32
  }
  func.func @transform_4(%arg0: i32) -> (i32, i32) {
    %c0_i32 = arith.constant 0 : i32
    %c0_i32_0 = arith.constant 0 : i32
    %c0_i32_1 = arith.constant 0 : i32
    return %c0_i32, %c0_i32_0 : i32, i32
  }
  func.func @transform_5(%arg0: i32) -> (i32, i32) {
    %c0_i32 = arith.constant 0 : i32
    %c0_i32_0 = arith.constant 0 : i32
    %c0_i32_1 = arith.constant 0 : i32
    return %c0_i32, %c0_i32_0 : i32, i32
  }
  func.func @transform_6(%arg0: i32) -> (i32, i32) {
    %c0_i32 = arith.constant 0 : i32
    %c0_i32_0 = arith.constant 0 : i32
    %c0_i32_1 = arith.constant 0 : i32
    return %c0_i32, %c0_i32_0 : i32, i32
  }
  func.func @transform_7(%arg0: i32) -> (i32, i32) {
    %c0_i32 = arith.constant 0 : i32
    %c0_i32_0 = arith.constant 0 : i32
    %c0_i32_1 = arith.constant 0 : i32
    return %c0_i32, %c0_i32_0 : i32, i32
  }
  func.func @transform_8(%arg0: i32) -> (i32, i32) {
    %c0_i32 = arith.constant 0 : i32
    %c0_i32_0 = arith.constant 0 : i32
    %c0_i32_1 = arith.constant 0 : i32
    return %c0_i32, %c0_i32_0 : i32, i32
  }
  func.func @transform_9(%arg0: i32) -> (i32, i32) {
    %c0_i32 = arith.constant 0 : i32
    %c0_i32_0 = arith.constant 0 : i32
    %c0_i32_1 = arith.constant 0 : i32
    return %c0_i32, %c0_i32_0 : i32, i32
  }
  func.func @transform_10(%arg0: i32) -> (i32, i32) {
    %c0_i32 = arith.constant 0 : i32
    %c0_i32_0 = arith.constant 0 : i32
    %c0_i32_1 = arith.constant 0 : i32
    return %c0_i32, %c0_i32_0 : i32, i32
  }
  func.func @transform_11(%arg0: i32) -> (i32, i32) {
    %c0_i32 = arith.constant 0 : i32
    %c0_i32_0 = arith.constant 0 : i32
    %c0_i32_1 = arith.constant 0 : i32
    return %c0_i32, %c0_i32_0 : i32, i32
  }
  func.func @transform_12(%arg0: i32) -> (i32, i32) {
    %c0_i32 = arith.constant 0 : i32
    %c0_i32_0 = arith.constant 0 : i32
    %c0_i32_1 = arith.constant 0 : i32
    return %c0_i32, %c0_i32_0 : i32, i32
  }
  func.func @transform_13(%arg0: i32) -> (i32, i32) {
    %c0_i32 = arith.constant 0 : i32
    %c0_i32_0 = arith.constant 0 : i32
    return %arg0, %c0_i32 : i32, i32
  }
}

</mosaic_0001>

<llo_original>
// kernel: mlpae_forward.1
$region0: #{mlpae_forward.1}
  #allocation0 [shape = 'u32[]', space=smem, size = 0x4, offset = 0x4, fixed_abs, tag = 'smem constant byte address 0x4 - core index']
  #allocation1 [shape = 'u32[72,128]{1,0:T(1,128)}', space=vmem, size = 0x9000, scoped, tag = 'internal scratch']
  %s0 = inlined_call_operand.vmem [shape: bf16[8,1024], index: 0, kind: input, shape index: {}]
  %s1 = inlined_call_operand.hbm [shape: bf16[1024,256], index: 1, kind: input, shape index: {}]
  %s2 = inlined_call_operand.vmem [shape: f32[1,256], index: 2, kind: input, shape index: {}]
  %s3 = inlined_call_operand.vmem [shape: bf16[256,128], index: 3, kind: input, shape index: {}]
  %s4 = inlined_call_operand.vmem [shape: f32[1,128], index: 4, kind: input, shape index: {}]
  %s5 = inlined_call_operand.hbm [shape: bf16[128,128], index: 5, kind: input, shape index: {}]
  %s6 = inlined_call_operand.vmem [shape: f32[1,128], index: 6, kind: input, shape index: {}]
  %s7 = inlined_call_operand.hbm [shape: bf16[128,128], index: 7, kind: input, shape index: {}]
  %s8 = inlined_call_operand.vmem [shape: f32[1,128], index: 8, kind: input, shape index: {}]
  %s9 = inlined_call_operand.vmem [shape: bf16[128,256], index: 9, kind: input, shape index: {}]
  %s10 = inlined_call_operand.vmem [shape: f32[1,256], index: 10, kind: input, shape index: {}]
  %s11 = inlined_call_operand.hbm [shape: bf16[256,1024], index: 11, kind: input, shape index: {}]
  %s12 = inlined_call_operand.vmem [shape: f32[1,1024], index: 12, kind: input, shape index: {}]
  %s13 = inlined_call_operand.vmem [shape: bf16[8,1024], index: 13, kind: output, shape index: {}]
  %s14 = sld [smem:[#allocation0]]
  $region78: #{mlpae_forward.1} parent=0
    _
  %s16 = ssub.s32 1, %s14
  %s17 = scalar_select 0, %s16, %s14
  $region1: #{mlpae_forward.1} parent=0
    #allocation2 [shape = 'u8[524288]{0}', space=vmem, size = 0x80000, scoped, tag = 'input window, operand 1, single buffered']
    #allocation3 [shape = 's32[1]{0}', space=sflag, size = 0x4, scoped, tag = 'scoped memory for mlpae_forward.1']
    #allocation4 [shape = 'u8[32768]{0}', space=vmem, size = 0x8000, scoped, tag = 'input window, operand 5, single buffered']
    #allocation5 [shape = 's32[1]{0}', space=sflag, size = 0x4, scoped, tag = 'scoped memory for mlpae_forward.1']
    #allocation6 [shape = 'u8[32768]{0}', space=vmem, size = 0x8000, scoped, tag = 'input window, operand 7, single buffered']
    #allocation7 [shape = 'u8[524288]{0}', space=vmem, size = 0x80000, scoped, tag = 'input window, operand 11, single buffered']
    #allocation8 [shape = 's32[1]{0}', space=sflag, size = 0x4, scoped, tag = 'scoped memory for mlpae_forward.1']
    %18 = vsyncpa [#allocation3], 0
    %19 = vsyncpa [#allocation5], 0
    %20 = vsyncpa [#allocation8], 0
    // Predicated region
    $region2: #{mlpae_forward.1} parent=1 // pred_check
      _
    $region3: #{mlpae_forward.1} parent=1 // pred_check_branch
      %22 = sbr.rel (0) target = $region5
    $region4: #{mlpae_forward.1} parent=1 // pred_region
      _
    $region5: #{mlpae_forward.1} parent=1 // pred_fallthru
      _
    // Predicated region
    $region6: #{mlpae_forward.1} parent=1 // pred_check
      _
    $region7: #{mlpae_forward.1} parent=1 // pred_check_branch
      %24 = sbr.rel (0) target = $region9
    $region8: #{mlpae_forward.1} parent=1 // pred_region
      %26 = vsyncadd [#allocation3], 0
      %s27 = sshll.u32 %s1, 4
      %s28 = int_to_ptr.hbm [resolvable:$true] %s27
      %s29 = sshll.u32 [#allocation2], 4
      %s30 = int_to_ptr.vmem [resolvable:$true] %s29
      %35 = dma.hbm_to_vmem [thread:$0]  %s28, 16384, %s30, [#allocation3], 128, 128, 8
    $region9: #{mlpae_forward.1} parent=1 // pred_fallthru
      _
    // Predicated region
    $region10: #{mlpae_forward.1} parent=1 // pred_check
      _
    $region11: #{mlpae_forward.1} parent=1 // pred_check_branch
      %37 = sbr.rel (0) target = $region13
    $region12: #{mlpae_forward.1} parent=1 // pred_region
      _
    $region13: #{mlpae_forward.1} parent=1 // pred_fallthru
      _
    // Predicated region
    $region14: #{mlpae_forward.1} parent=1 // pred_check
      _
    $region15: #{mlpae_forward.1} parent=1 // pred_check_branch
      %39 = sbr.rel (0) target = $region17
    $region16: #{mlpae_forward.1} parent=1 // pred_region
      _
    $region17: #{mlpae_forward.1} parent=1 // pred_fallthru
      _
    // Predicated region
    $region18: #{mlpae_forward.1} parent=1 // pred_check
      _
    $region19: #{mlpae_forward.1} parent=1 // pred_check_branch
      %41 = sbr.rel (0) target = $region21
    $region20: #{mlpae_forward.1} parent=1 // pred_region
      _
    $region21: #{mlpae_forward.1} parent=1 // pred_fallthru
      _
    // Predicated region
    $region22: #{mlpae_forward.1} parent=1 // pred_check
      _
    $region23: #{mlpae_forward.1} parent=1 // pred_check_branch
      %43 = sbr.rel (0) target = $region25
    $region24: #{mlpae_forward.1} parent=1 // pred_region
      %45 = vsyncadd [#allocation5], 0
      %s46 = sshll.u32 %s5, 4
      %s47 = int_to_ptr.hbm [resolvable:$true] %s46
      %s48 = sshll.u32 [#allocation4], 4
      %s49 = int_to_ptr.vmem [resolvable:$true] %s48
      %54 = dma.hbm_to_vmem [thread:$0]  %s47, 1024, %s49, [#allocation5], 64, 64, 4
    $region25: #{mlpae_forward.1} parent=1 // pred_fallthru
      _
    // Predicated region
    $region26: #{mlpae_forward.1} parent=1 // pred_check
      _
    $region27: #{mlpae_forward.1} parent=1 // pred_check_branch
      %56 = sbr.rel (0) target = $region29
    $region28: #{mlpae_forward.1} parent=1 // pred_region
      _
    $region29: #{mlpae_forward.1} parent=1 // pred_fallthru
      _
    // Predicated region
    $region30: #{mlpae_forward.1} parent=1 // pred_check
      _
    $region31: #{mlpae_forward.1} parent=1 // pred_check_branch
      %58 = sbr.rel (0) target = $region33
    $region32: #{mlpae_forward.1} parent=1 // pred_region
      %60 = vsyncadd [#allocation5], 0
      %s61 = sshll.u32 %s7, 4
      %s62 = int_to_ptr.hbm [resolvable:$true] %s61
      %s63 = sshll.u32 [#allocation6], 4
      %s64 = int_to_ptr.vmem [resolvable:$true] %s63
      %69 = dma.hbm_to_vmem [thread:$0]  %s62, 1024, %s64, [#allocation5], 64, 64, 4
    $region33: #{mlpae_forward.1} parent=1 // pred_fallthru
      _
    // Predicated region
    $region34: #{mlpae_forward.1} parent=1 // pred_check
      _
    $region35: #{mlpae_forward.1} parent=1 // pred_check_branch
      %71 = sbr.rel (0) target = $region37
    $region36: #{mlpae_forward.1} parent=1 // pred_region
      _
    $region37: #{mlpae_forward.1} parent=1 // pred_fallthru
      _
    // Predicated region
    $region38: #{mlpae_forward.1} parent=1 // pred_check
      _
    $region39: #{mlpae_forward.1} parent=1 // pred_check_branch
      %73 = sbr.rel (0) target = $region41
    $region40: #{mlpae_forward.1} parent=1 // pred_region
      _
    $region41: #{mlpae_forward.1} parent=1 // pred_fallthru
      _
    // Predicated region
    $region42: #{mlpae_forward.1} parent=1 // pred_check
      _
    $region43: #{mlpae_forward.1} parent=1 // pred_check_branch
      %75 = sbr.rel (0) target = $region45
    $region44: #{mlpae_forward.1} parent=1 // pred_region
      _
    $region45: #{mlpae_forward.1} parent=1 // pred_fallthru
      _
    // Predicated region
    $region46: #{mlpae_forward.1} parent=1 // pred_check
      _
    $region47: #{mlpae_forward.1} parent=1 // pred_check_branch
      %77 = sbr.rel (0) target = $region49
    $region48: #{mlpae_forward.1} parent=1 // pred_region
      %79 = vsyncadd [#allocation8], 0
      %s80 = sshll.u32 %s11, 4
      %s81 = int_to_ptr.hbm [resolvable:$true] %s80
      %s82 = sshll.u32 [#allocation7], 4
      %s83 = int_to_ptr.vmem [resolvable:$true] %s82
      %88 = dma.hbm_to_vmem [thread:$0]  %s81, 16384, %s83, [#allocation8], 512, 512, 32
    $region49: #{mlpae_forward.1} parent=1 // pred_fallthru
      _
    // Predicated region
    $region50: #{mlpae_forward.1} parent=1 // pred_check
      _
    $region51: #{mlpae_forward.1} parent=1 // pred_check_branch
      %90 = sbr.rel (0) target = $region53
    $region52: #{mlpae_forward.1} parent=1 // pred_region
      _
    $region53: #{mlpae_forward.1} parent=1 // pred_fallthru
      _
    // Predicated region
    $region54: #{mlpae_forward.1} parent=1 // pred_check
      _
    $region55: #{mlpae_forward.1} parent=1 // pred_check_branch
      %92 = sbr.rel (0) target = $region57
    $region56: #{mlpae_forward.1} parent=1 // pred_region
      %94 = dma.done [#allocation3], 16384
    $region57: #{mlpae_forward.1} parent=1 // pred_fallthru
      _
    // Predicated region
    $region58: #{mlpae_forward.1} parent=1 // pred_check
      _
    $region59: #{mlpae_forward.1} parent=1 // pred_check_branch
      %96 = sbr.rel (0) target = $region61
    $region60: #{mlpae_forward.1} parent=1 // pred_region
      %98 = dma.done [#allocation5], 1024
    $region61: #{mlpae_forward.1} parent=1 // pred_fallthru
      _
    // Predicated region
    $region62: #{mlpae_forward.1} parent=1 // pred_check
      _
    $region63: #{mlpae_forward.1} parent=1 // pred_check_branch
      %100 = sbr.rel (0) target = $region65
    $region64: #{mlpae_forward.1} parent=1 // pred_region
      %102 = dma.done [#allocation5], 1024
    $region65: #{mlpae_forward.1} parent=1 // pred_fallthru
      _
    // Predicated region
    $region66: #{mlpae_forward.1} parent=1 // pred_check
      _
    $region67: #{mlpae_forward.1} parent=1 // pred_check_branch
      %104 = sbr.rel (0) target = $region69
    $region68: #{mlpae_forward.1} parent=1 // pred_region
      %106 = dma.done [#allocation8], 16384
    $region69: #{mlpae_forward.1} parent=1 // pred_fallthru
      _
    %v107 = vld [vmem:[%s0] sm:$0xff]
    %v108 = vld [vmem:[%s0 + $0x8] sm:$0xff]
    %v109 = vld [vmem:[%s0 + $0x10] sm:$0xff]
    %v110 = vld [vmem:[%s0 + $0x18] sm:$0xff]
    %v111 = vld [vmem:[#allocation2] sm:$0xff]
    %v112 = vld [vmem:[#allocation2 + $0x8] sm:$0xff]
    %v113 = vld [vmem:[#allocation2 + $0x10] sm:$0xff]
    %v114 = vld [vmem:[#allocation2 + $0x18] sm:$0xff]
    %v115 = vld [vmem:[#allocation2 + $0x20] sm:$0xff]
    %v116 = vld [vmem:[#allocation2 + $0x28] sm:$0xff]
    %v117 = vld [vmem:[#allocation2 + $0x30] sm:$0xff]
    %v118 = vld [vmem:[#allocation2 + $0x38] sm:$0xff]
    %v119 = vld [vmem:[#allocation2 + $0x40] sm:$0xff]
    %v120 = vld [vmem:[#allocation2 + $0x48] sm:$0xff]
    %v121 = vld [vmem:[#allocation2 + $0x50] sm:$0xff]
    %v122 = vld [vmem:[#allocation2 + $0x58] sm:$0xff]
    %v123 = vld [vmem:[#allocation2 + $0x60] sm:$0xff]
    %v124 = vld [vmem:[#allocation2 + $0x68] sm:$0xff]
    %v125 = vld [vmem:[#allocation2 + $0x70] sm:$0xff]
    %v126 = vld [vmem:[#allocation2 + $0x78] sm:$0xff]
    %v127 = vld [vmem:[#allocation2 + $0x80] sm:$0xff]
    %v128 = vld [vmem:[#allocation2 + $0x88] sm:$0xff]
    %v129 = vld [vmem:[#allocation2 + $0x90] sm:$0xff]
    %v130 = vld [vmem:[#allocation2 + $0x98] sm:$0xff]
    %v131 = vld [vmem:[#allocation2 + $0xa0] sm:$0xff]
    %v132 = vld [vmem:[#allocation2 + $0xa8] sm:$0xff]
    %v133 = vld [vmem:[#allocation2 + $0xb0] sm:$0xff]
    %v134 = vld [vmem:[#allocation2 + $0xb8] sm:$0xff]
    %v135 = vld [vmem:[#allocation2 + $0xc0] sm:$0xff]
    %v136 = vld [vmem:[#allocation2 + $0xc8] sm:$0xff]
    %v137 = vld [vmem:[#allocation2 + $0xd0] sm:$0xff]
    %v138 = vld [vmem:[#allocation2 + $0xd8] sm:$0xff]
    %v139 = vld [vmem:[#allocation2 + $0xe0] sm:$0xff]
    %v140 = vld [vmem:[#allocation2 + $0xe8] sm:$0xff]
    %v141 = vld [vmem:[#allocation2 + $0xf0] sm:$0xff]
    %v142 = vld [vmem:[#allocation2 + $0xf8] sm:$0xff]
    %v143 = vld [vmem:[#allocation2 + $0x100] sm:$0xff]
    %v144 = vld [vmem:[#allocation2 + $0x108] sm:$0xff]
    %v145 = vld [vmem:[#allocation2 + $0x110] sm:$0xff]
    %v146 = vld [vmem:[#allocation2 + $0x118] sm:$0xff]
    %v147 = vld [vmem:[#allocation2 + $0x120] sm:$0xff]
    %v148 = vld [vmem:[#allocation2 + $0x128] sm:$0xff]
    %v149 = vld [vmem:[#allocation2 + $0x130] sm:$0xff]
    %v150 = vld [vmem:[#allocation2 + $0x138] sm:$0xff]
    %v151 = vld [vmem:[#allocation2 + $0x140] sm:$0xff]
    %v152 = vld [vmem:[#allocation2 + $0x148] sm:$0xff]
    %v153 = vld [vmem:[#allocation2 + $0x150] sm:$0xff]
    %v154 = vld [vmem:[#allocation2 + $0x158] sm:$0xff]
    %v155 = vld [vmem:[#allocation2 + $0x160] sm:$0xff]
    %v156 = vld [vmem:[#allocation2 + $0x168] sm:$0xff]
    %v157 = vld [vmem:[#allocation2 + $0x170] sm:$0xff]
    %v158 = vld [vmem:[#allocation2 + $0x178] sm:$0xff]
    %v159 = vld [vmem:[#allocation2 + $0x180] sm:$0xff]
    %v160 = vld [vmem:[#allocation2 + $0x188] sm:$0xff]
    %v161 = vld [vmem:[#allocation2 + $0x190] sm:$0xff]
    %v162 = vld [vmem:[#allocation2 + $0x198] sm:$0xff]
    %v163 = vld [vmem:[#allocation2 + $0x1a0] sm:$0xff]
    %v164 = vld [vmem:[#allocation2 + $0x1a8] sm:$0xff]
    %v165 = vld [vmem:[#allocation2 + $0x1b0] sm:$0xff]
    %v166 = vld [vmem:[#allocation2 + $0x1b8] sm:$0xff]
    %v167 = vld [vmem:[#allocation2 + $0x1c0] sm:$0xff]
    %v168 = vld [vmem:[#allocation2 + $0x1c8] sm:$0xff]
    %v169 = vld [vmem:[#allocation2 + $0x1d0] sm:$0xff]
    %v170 = vld [vmem:[#allocation2 + $0x1d8] sm:$0xff]
    %v171 = vld [vmem:[#allocation2 + $0x1e0] sm:$0xff]
    %v172 = vld [vmem:[#allocation2 + $0x1e8] sm:$0xff]
    %v173 = vld [vmem:[#allocation2 + $0x1f0] sm:$0xff]
    %v174 = vld [vmem:[#allocation2 + $0x1f8] sm:$0xff]
    %v175 = vld [vmem:[#allocation2 + $0x200] sm:$0xff]
    %v176 = vld [vmem:[#allocation2 + $0x208] sm:$0xff]
    %v177 = vld [vmem:[#allocation2 + $0x210] sm:$0xff]
    %v178 = vld [vmem:[#allocation2 + $0x218] sm:$0xff]
    %v179 = vld [vmem:[#allocation2 + $0x220] sm:$0xff]
    %v180 = vld [vmem:[#allocation2 + $0x228] sm:$0xff]
    %v181 = vld [vmem:[#allocation2 + $0x230] sm:$0xff]
    %v182 = vld [vmem:[#allocation2 + $0x238] sm:$0xff]
    %v183 = vld [vmem:[#allocation2 + $0x240] sm:$0xff]
    %v184 = vld [vmem:[#allocation2 + $0x248] sm:$0xff]
    %v185 = vld [vmem:[#allocation2 + $0x250] sm:$0xff]
    %v186 = vld [vmem:[#allocation2 + $0x258] sm:$0xff]
    %v187 = vld [vmem:[#allocation2 + $0x260] sm:$0xff]
    %v188 = vld [vmem:[#allocation2 + $0x268] sm:$0xff]
    %v189 = vld [vmem:[#allocation2 + $0x270] sm:$0xff]
    %v190 = vld [vmem:[#allocation2 + $0x278] sm:$0xff]
    %v191 = vld [vmem:[#allocation2 + $0x280] sm:$0xff]
    %v192 = vld [vmem:[#allocation2 + $0x288] sm:$0xff]
    %v193 = vld [vmem:[#allocation2 + $0x290] sm:$0xff]
    %v194 = vld [vmem:[#allocation2 + $0x298] sm:$0xff]
    %v195 = vld [vmem:[#allocation2 + $0x2a0] sm:$0xff]
    %v196 = vld [vmem:[#allocation2 + $0x2a8] sm:$0xff]
    %v197 = vld [vmem:[#allocation2 + $0x2b0] sm:$0xff]
    %v198 = vld [vmem:[#allocation2 + $0x2b8] sm:$0xff]
    %v199 = vld [vmem:[#allocation2 + $0x2c0] sm:$0xff]
    %v200 = vld [vmem:[#allocation2 + $0x2c8] sm:$0xff]
    %v201 = vld [vmem:[#allocation2 + $0x2d0] sm:$0xff]
    %v202 = vld [vmem:[#allocation2 + $0x2d8] sm:$0xff]
    %v203 = vld [vmem:[#allocation2 + $0x2e0] sm:$0xff]
    %v204 = vld [vmem:[#allocation2 + $0x2e8] sm:$0xff]
    %v205 = vld [vmem:[#allocation2 + $0x2f0] sm:$0xff]
    %v206 = vld [vmem:[#allocation2 + $0x2f8] sm:$0xff]
    %v207 = vld [vmem:[#allocation2 + $0x300] sm:$0xff]
    %v208 = vld [vmem:[#allocation2 + $0x308] sm:$0xff]
    %v209 = vld [vmem:[#allocation2 + $0x310] sm:$0xff]
    %v210 = vld [vmem:[#allocation2 + $0x318] sm:$0xff]
    %v211 = vld [vmem:[#allocation2 + $0x320] sm:$0xff]
    %v212 = vld [vmem:[#allocation2 + $0x328] sm:$0xff]
    %v213 = vld [vmem:[#allocation2 + $0x330] sm:$0xff]
    %v214 = vld [vmem:[#allocation2 + $0x338] sm:$0xff]
    %v215 = vld [vmem:[#allocation2 + $0x340] sm:$0xff]
    %v216 = vld [vmem:[#allocation2 + $0x348] sm:$0xff]
    %v217 = vld [vmem:[#allocation2 + $0x350] sm:$0xff]
    %v218 = vld [vmem:[#allocation2 + $0x358] sm:$0xff]
    %v219 = vld [vmem:[#allocation2 + $0x360] sm:$0xff]
    %v220 = vld [vmem:[#allocation2 + $0x368] sm:$0xff]
    %v221 = vld [vmem:[#allocation2 + $0x370] sm:$0xff]
    %v222 = vld [vmem:[#allocation2 + $0x378] sm:$0xff]
    %v223 = vld [vmem:[#allocation2 + $0x380] sm:$0xff]
    %v224 = vld [vmem:[#allocation2 + $0x388] sm:$0xff]
    %v225 = vld [vmem:[#allocation2 + $0x390] sm:$0xff]
    %v226 = vld [vmem:[#allocation2 + $0x398] sm:$0xff]
    %v227 = vld [vmem:[#allocation2 + $0x3a0] sm:$0xff]
    %v228 = vld [vmem:[#allocation2 + $0x3a8] sm:$0xff]
    %v229 = vld [vmem:[#allocation2 + $0x3b0] sm:$0xff]
    %v230 = vld [vmem:[#allocation2 + $0x3b8] sm:$0xff]
    %v231 = vld [vmem:[#allocation2 + $0x3c0] sm:$0xff]
    %v232 = vld [vmem:[#allocation2 + $0x3c8] sm:$0xff]
    %v233 = vld [vmem:[#allocation2 + $0x3d0] sm:$0xff]
    %v234 = vld [vmem:[#allocation2 + $0x3d8] sm:$0xff]
    %v235 = vld [vmem:[#allocation2 + $0x3e0] sm:$0xff]
    %v236 = vld [vmem:[#allocation2 + $0x3e8] sm:$0xff]
    %v237 = vld [vmem:[#allocation2 + $0x3f0] sm:$0xff]
    %v238 = vld [vmem:[#allocation2 + $0x3f8] sm:$0xff]
    %v239 = vld [vmem:[%s2] sm:$0x3]
    %v241 = vperm.slane %v239, 0
    %v242 = vperm.slane %v239, 1
    %v249 = vunpack.c.l.b16 %v107
    %v250 = vunpack.c.h.b16 %v107
    %v251 = vunpack.c.l.b16 %v108
    %v252 = vunpack.c.h.b16 %v108
    %v253 = vunpack.c.l.b16 %v109
    %v254 = vunpack.c.h.b16 %v109
    %v255 = vunpack.c.l.b16 %v110
    %v256 = vunpack.c.h.b16 %v110
    %v257 = vpack.c.b16 %v249, %v249
    %v258 = vpack.c.b16 %v250, %v250
    %v259 = vpack.c.b16 %v251, %v251
    %v260 = vpack.c.b16 %v252, %v252
    %v261 = vpack.c.b16 %v253, %v253
    %v262 = vpack.c.b16 %v254, %v254
    %v263 = vpack.c.b16 %v255, %v255
    %v264 = vpack.c.b16 %v256, %v256
    %v401 = vunpack.c.l.b16 %v111
    %v402 = vunpack.c.h.b16 %v111
    %v403 = vunpack.c.l.b16 %v112
    %v404 = vunpack.c.h.b16 %v112
    %v405 = vunpack.c.l.b16 %v113
    %v406 = vunpack.c.h.b16 %v113
    %v407 = vunpack.c.l.b16 %v114
    %v408 = vunpack.c.h.b16 %v114
    %v409 = vunpack.c.l.b16 %v115
    %v410 = vunpack.c.h.b16 %v115
    %v411 = vunpack.c.l.b16 %v116
    %v412 = vunpack.c.h.b16 %v116
    %v413 = vunpack.c.l.b16 %v117
    %v414 = vunpack.c.h.b16 %v117
    %v415 = vunpack.c.l.b16 %v118
    %v416 = vunpack.c.h.b16 %v118
    %v417 = vunpack.c.l.b16 %v119
    %v418 = vunpack.c.h.b16 %v119
    %v419 = vunpack.c.l.b16 %v120
    %v420 = vunpack.c.h.b16 %v120
    %v421 = vunpack.c.l.b16 %v121
    %v422 = vunpack.c.h.b16 %v121
    %v423 = vunpack.c.l.b16 %v122
    %v424 = vunpack.c.h.b16 %v122
    %v425 = vunpack.c.l.b16 %v123
    %v426 = vunpack.c.h.b16 %v123
    %v427 = vunpack.c.l.b16 %v124
    %v428 = vunpack.c.h.b16 %v124
    %v429 = vunpack.c.l.b16 %v125
    %v430 = vunpack.c.h.b16 %v125
    %v431 = vunpack.c.l.b16 %v126
    %v432 = vunpack.c.h.b16 %v126
    %v433 = vunpack.c.l.b16 %v127
    %v434 = vunpack.c.h.b16 %v127
    %v435 = vunpack.c.l.b16 %v128
    %v436 = vunpack.c.h.b16 %v128
    %v437 = vunpack.c.l.b16 %v129
    %v438 = vunpack.c.h.b16 %v129
    %v439 = vunpack.c.l.b16 %v130
    %v440 = vunpack.c.h.b16 %v130
    %v441 = vunpack.c.l.b16 %v131
    %v442 = vunpack.c.h.b16 %v131
    %v443 = vunpack.c.l.b16 %v132
    %v444 = vunpack.c.h.b16 %v132
    %v445 = vunpack.c.l.b16 %v133
    %v446 = vunpack.c.h.b16 %v133
    %v447 = vunpack.c.l.b16 %v134
    %v448 = vunpack.c.h.b16 %v134
    %v449 = vunpack.c.l.b16 %v135
    %v450 = vunpack.c.h.b16 %v135
    %v451 = vunpack.c.l.b16 %v136
    %v452 = vunpack.c.h.b16 %v136
    %v453 = vunpack.c.l.b16 %v137
    %v454 = vunpack.c.h.b16 %v137
    %v455 = vunpack.c.l.b16 %v138
    %v456 = vunpack.c.h.b16 %v138
    %v457 = vunpack.c.l.b16 %v139
    %v458 = vunpack.c.h.b16 %v139
    %v459 = vunpack.c.l.b16 %v140
    %v460 = vunpack.c.h.b16 %v140
    %v461 = vunpack.c.l.b16 %v141
    %v462 = vunpack.c.h.b16 %v141
    %v463 = vunpack.c.l.b16 %v142
    %v464 = vunpack.c.h.b16 %v142
    %v465 = vunpack.c.l.b16 %v143
    %v466 = vunpack.c.h.b16 %v143
    %v467 = vunpack.c.l.b16 %v144
    %v468 = vunpack.c.h.b16 %v144
    %v469 = vunpack.c.l.b16 %v145
    %v470 = vunpack.c.h.b16 %v145
    %v471 = vunpack.c.l.b16 %v146
    %v472 = vunpack.c.h.b16 %v146
    %v473 = vunpack.c.l.b16 %v147
    %v474 = vunpack.c.h.b16 %v147
    %v475 = vunpack.c.l.b16 %v148
    %v476 = vunpack.c.h.b16 %v148
    %v477 = vunpack.c.l.b16 %v149
    %v478 = vunpack.c.h.b16 %v149
    %v479 = vunpack.c.l.b16 %v150
    %v480 = vunpack.c.h.b16 %v150
    %v481 = vunpack.c.l.b16 %v151
    %v482 = vunpack.c.h.b16 %v151
    %v483 = vunpack.c.l.b16 %v152
    %v484 = vunpack.c.h.b16 %v152
    %v485 = vunpack.c.l.b16 %v153
    %v486 = vunpack.c.h.b16 %v153
    %v487 = vunpack.c.l.b16 %v154
    %v488 = vunpack.c.h.b16 %v154
    %v489 = vunpack.c.l.b16 %v155
    %v490 = vunpack.c.h.b16 %v155
    %v491 = vunpack.c.l.b16 %v156
    %v492 = vunpack.c.h.b16 %v156
    %v493 = vunpack.c.l.b16 %v157
    %v494 = vunpack.c.h.b16 %v157
    %v495 = vunpack.c.l.b16 %v158
    %v496 = vunpack.c.h.b16 %v158
    %v497 = vunpack.c.l.b16 %v159
    %v498 = vunpack.c.h.b16 %v159
    %v499 = vunpack.c.l.b16 %v160
    %v500 = vunpack.c.h.b16 %v160
    %v501 = vunpack.c.l.b16 %v161
    %v502 = vunpack.c.h.b16 %v161
    %v503 = vunpack.c.l.b16 %v162
    %v504 = vunpack.c.h.b16 %v162
    %v505 = vunpack.c.l.b16 %v163
    %v506 = vunpack.c.h.b16 %v163
    %v507 = vunpack.c.l.b16 %v164
    %v508 = vunpack.c.h.b16 %v164
    %v509 = vunpack.c.l.b16 %v165
    %v510 = vunpack.c.h.b16 %v165
    %v511 = vunpack.c.l.b16 %v166
    %v512 = vunpack.c.h.b16 %v166
    %v513 = vunpack.c.l.b16 %v167
    %v514 = vunpack.c.h.b16 %v167
    %v515 = vunpack.c.l.b16 %v168
    %v516 = vunpack.c.h.b16 %v168
    %v517 = vunpack.c.l.b16 %v169
    %v518 = vunpack.c.h.b16 %v169
    %v519 = vunpack.c.l.b16 %v170
    %v520 = vunpack.c.h.b16 %v170
    %v521 = vunpack.c.l.b16 %v171
    %v522 = vunpack.c.h.b16 %v171
    %v523 = vunpack.c.l.b16 %v172
    %v524 = vunpack.c.h.b16 %v172
    %v525 = vunpack.c.l.b16 %v173
    %v526 = vunpack.c.h.b16 %v173
    %v527 = vunpack.c.l.b16 %v174
    %v528 = vunpack.c.h.b16 %v174
    %v529 = vunpack.c.l.b16 %v175
    %v530 = vunpack.c.h.b16 %v175
    %v531 = vunpack.c.l.b16 %v176
    %v532 = vunpack.c.h.b16 %v176
    %v533 = vunpack.c.l.b16 %v177
    %v534 = vunpack.c.h.b16 %v177
    %v535 = vunpack.c.l.b16 %v178
    %v536 = vunpack.c.h.b16 %v178
    %v537 = vunpack.c.l.b16 %v179
    %v538 = vunpack.c.h.b16 %v179
    %v539 = vunpack.c.l.b16 %v180
    %v540 = vunpack.c.h.b16 %v180
    %v541 = vunpack.c.l.b16 %v181
    %v542 = vunpack.c.h.b16 %v181
    %v543 = vunpack.c.l.b16 %v182
    %v544 = vunpack.c.h.b16 %v182
    %v545 = vunpack.c.l.b16 %v183
    %v546 = vunpack.c.h.b16 %v183
    %v547 = vunpack.c.l.b16 %v184
    %v548 = vunpack.c.h.b16 %v184
    %v549 = vunpack.c.l.b16 %v185
    %v550 = vunpack.c.h.b16 %v185
    %v551 = vunpack.c.l.b16 %v186
    %v552 = vunpack.c.h.b16 %v186
    %v553 = vunpack.c.l.b16 %v187
    %v554 = vunpack.c.h.b16 %v187
    %v555 = vunpack.c.l.b16 %v188
    %v556 = vunpack.c.h.b16 %v188
    %v557 = vunpack.c.l.b16 %v189
    %v558 = vunpack.c.h.b16 %v189
    %v559 = vunpack.c.l.b16 %v190
    %v560 = vunpack.c.h.b16 %v190
    %v561 = vunpack.c.l.b16 %v191
    %v562 = vunpack.c.h.b16 %v191
    %v563 = vunpack.c.l.b16 %v192
    %v564 = vunpack.c.h.b16 %v192
    %v565 = vunpack.c.l.b16 %v193
    %v566 = vunpack.c.h.b16 %v193
    %v567 = vunpack.c.l.b16 %v194
    %v568 = vunpack.c.h.b16 %v194
    %v569 = vunpack.c.l.b16 %v195
    %v570 = vunpack.c.h.b16 %v195
    %v571 = vunpack.c.l.b16 %v196
    %v572 = vunpack.c.h.b16 %v196
    %v573 = vunpack.c.l.b16 %v197
    %v574 = vunpack.c.h.b16 %v197
    %v575 = vunpack.c.l.b16 %v198
    %v576 = vunpack.c.h.b16 %v198
    %v577 = vunpack.c.l.b16 %v199
    %v578 = vunpack.c.h.b16 %v199
    %v579 = vunpack.c.l.b16 %v200
    %v580 = vunpack.c.h.b16 %v200
    %v581 = vunpack.c.l.b16 %v201
    %v582 = vunpack.c.h.b16 %v201
    %v583 = vunpack.c.l.b16 %v202
    %v584 = vunpack.c.h.b16 %v202
    %v585 = vunpack.c.l.b16 %v203
    %v586 = vunpack.c.h.b16 %v203
    %v587 = vunpack.c.l.b16 %v204
    %v588 = vunpack.c.h.b16 %v204
    %v589 = vunpack.c.l.b16 %v205
    %v590 = vunpack.c.h.b16 %v205
    %v591 = vunpack.c.l.b16 %v206
    %v592 = vunpack.c.h.b16 %v206
    %v593 = vunpack.c.l.b16 %v207
    %v594 = vunpack.c.h.b16 %v207
    %v595 = vunpack.c.l.b16 %v208
    %v596 = vunpack.c.h.b16 %v208
    %v597 = vunpack.c.l.b16 %v209
    %v598 = vunpack.c.h.b16 %v209
    %v599 = vunpack.c.l.b16 %v210
    %v600 = vunpack.c.h.b16 %v210
    %v601 = vunpack.c.l.b16 %v211
    %v602 = vunpack.c.h.b16 %v211
    %v603 = vunpack.c.l.b16 %v212
    %v604 = vunpack.c.h.b16 %v212
    %v605 = vunpack.c.l.b16 %v213
    %v606 = vunpack.c.h.b16 %v213
    %v607 = vunpack.c.l.b16 %v214
    %v608 = vunpack.c.h.b16 %v214
    %v609 = vunpack.c.l.b16 %v215
    %v610 = vunpack.c.h.b16 %v215
    %v611 = vunpack.c.l.b16 %v216
    %v612 = vunpack.c.h.b16 %v216
    %v613 = vunpack.c.l.b16 %v217
    %v614 = vunpack.c.h.b16 %v217
    %v615 = vunpack.c.l.b16 %v218
    %v616 = vunpack.c.h.b16 %v218
    %v617 = vunpack.c.l.b16 %v219
    %v618 = vunpack.c.h.b16 %v219
    %v619 = vunpack.c.l.b16 %v220
    %v620 = vunpack.c.h.b16 %v220
    %v621 = vunpack.c.l.b16 %v221
    %v622 = vunpack.c.h.b16 %v221
    %v623 = vunpack.c.l.b16 %v222
    %v624 = vunpack.c.h.b16 %v222
    %v625 = vunpack.c.l.b16 %v223
    %v626 = vunpack.c.h.b16 %v223
    %v627 = vunpack.c.l.b16 %v224
    %v628 = vunpack.c.h.b16 %v224
    %v629 = vunpack.c.l.b16 %v225
    %v630 = vunpack.c.h.b16 %v225
    %v631 = vunpack.c.l.b16 %v226
    %v632 = vunpack.c.h.b16 %v226
    %v633 = vunpack.c.l.b16 %v227
    %v634 = vunpack.c.h.b16 %v227
    %v635 = vunpack.c.l.b16 %v228
    %v636 = vunpack.c.h.b16 %v228
    %v637 = vunpack.c.l.b16 %v229
    %v638 = vunpack.c.h.b16 %v229
    %v639 = vunpack.c.l.b16 %v230
    %v640 = vunpack.c.h.b16 %v230
    %v641 = vunpack.c.l.b16 %v231
    %v642 = vunpack.c.h.b16 %v231
    %v643 = vunpack.c.l.b16 %v232
    %v644 = vunpack.c.h.b16 %v232
    %v645 = vunpack.c.l.b16 %v233
    %v646 = vunpack.c.h.b16 %v233
    %v647 = vunpack.c.l.b16 %v234
    %v648 = vunpack.c.h.b16 %v234
    %v649 = vunpack.c.l.b16 %v235
    %v650 = vunpack.c.h.b16 %v235
    %v651 = vunpack.c.l.b16 %v236
    %v652 = vunpack.c.h.b16 %v236
    %v653 = vunpack.c.l.b16 %v237
    %v654 = vunpack.c.h.b16 %v237
    %v655 = vunpack.c.l.b16 %v238
    %v656 = vunpack.c.h.b16 %v238
    %v657 = vpack.c.b16 %v403, %v401
    %v658 = vpack.c.b16 %v404, %v402
    %v659 = vpack.c.b16 %v407, %v405
    %v660 = vpack.c.b16 %v408, %v406
    %v661 = vpack.c.b16 %v411, %v409
    %v662 = vpack.c.b16 %v412, %v410
    %v663 = vpack.c.b16 %v415, %v413
    %v664 = vpack.c.b16 %v416, %v414
    %v665 = vpack.c.b16 %v419, %v417
    %v666 = vpack.c.b16 %v420, %v418
    %v667 = vpack.c.b16 %v423, %v421
    %v668 = vpack.c.b16 %v424, %v422
    %v669 = vpack.c.b16 %v427, %v425
    %v670 = vpack.c.b16 %v428, %v426
    %v671 = vpack.c.b16 %v431, %v429
    %v672 = vpack.c.b16 %v432, %v430
    %v673 = vpack.c.b16 %v435, %v433
    %v674 = vpack.c.b16 %v436, %v434
    %v675 = vpack.c.b16 %v439, %v437
    %v676 = vpack.c.b16 %v440, %v438
    %v677 = vpack.c.b16 %v443, %v441
    %v678 = vpack.c.b16 %v444, %v442
    %v679 = vpack.c.b16 %v447, %v445
    %v680 = vpack.c.b16 %v448, %v446
    %v681 = vpack.c.b16 %v451, %v449
    %v682 = vpack.c.b16 %v452, %v450
    %v683 = vpack.c.b16 %v455, %v453
    %v684 = vpack.c.b16 %v456, %v454
    %v685 = vpack.c.b16 %v459, %v457
    %v686 = vpack.c.b16 %v460, %v458
    %v687 = vpack.c.b16 %v463, %v461
    %v688 = vpack.c.b16 %v464, %v462
    %v689 = vpack.c.b16 %v467, %v465
    %v690 = vpack.c.b16 %v468, %v466
    %v691 = vpack.c.b16 %v471, %v469
    %v692 = vpack.c.b16 %v472, %v470
    %v693 = vpack.c.b16 %v475, %v473
    %v694 = vpack.c.b16 %v476, %v474
    %v695 = vpack.c.b16 %v479, %v477
    %v696 = vpack.c.b16 %v480, %v478
    %v697 = vpack.c.b16 %v483, %v481
    %v698 = vpack.c.b16 %v484, %v482
    %v699 = vpack.c.b16 %v487, %v485
    %v700 = vpack.c.b16 %v488, %v486
    %v701 = vpack.c.b16 %v491, %v489
    %v702 = vpack.c.b16 %v492, %v490
    %v703 = vpack.c.b16 %v495, %v493
    %v704 = vpack.c.b16 %v496, %v494
    %v705 = vpack.c.b16 %v499, %v497
    %v706 = vpack.c.b16 %v500, %v498
    %v707 = vpack.c.b16 %v503, %v501
    %v708 = vpack.c.b16 %v504, %v502
    %v709 = vpack.c.b16 %v507, %v505
    %v710 = vpack.c.b16 %v508, %v506
    %v711 = vpack.c.b16 %v511, %v509
    %v712 = vpack.c.b16 %v512, %v510
    %v713 = vpack.c.b16 %v515, %v513
    %v714 = vpack.c.b16 %v516, %v514
    %v715 = vpack.c.b16 %v519, %v517
    %v716 = vpack.c.b16 %v520, %v518
    %v717 = vpack.c.b16 %v523, %v521
    %v718 = vpack.c.b16 %v524, %v522
    %v719 = vpack.c.b16 %v527, %v525
    %v720 = vpack.c.b16 %v528, %v526
    %v721 = vpack.c.b16 %v531, %v529
    %v722 = vpack.c.b16 %v532, %v530
    %v723 = vpack.c.b16 %v535, %v533
    %v724 = vpack.c.b16 %v536, %v534
    %v725 = vpack.c.b16 %v539, %v537
    %v726 = vpack.c.b16 %v540, %v538
    %v727 = vpack.c.b16 %v543, %v541
    %v728 = vpack.c.b16 %v544, %v542
    %v729 = vpack.c.b16 %v547, %v545
    %v730 = vpack.c.b16 %v548, %v546
    %v731 = vpack.c.b16 %v551, %v549
    %v732 = vpack.c.b16 %v552, %v550
    %v733 = vpack.c.b16 %v555, %v553
    %v734 = vpack.c.b16 %v556, %v554
    %v735 = vpack.c.b16 %v559, %v557
    %v736 = vpack.c.b16 %v560, %v558
    %v737 = vpack.c.b16 %v563, %v561
    %v738 = vpack.c.b16 %v564, %v562
    %v739 = vpack.c.b16 %v567, %v565
    %v740 = vpack.c.b16 %v568, %v566
    %v741 = vpack.c.b16 %v571, %v569
    %v742 = vpack.c.b16 %v572, %v570
    %v743 = vpack.c.b16 %v575, %v573
    %v744 = vpack.c.b16 %v576, %v574
    %v745 = vpack.c.b16 %v579, %v577
    %v746 = vpack.c.b16 %v580, %v578
    %v747 = vpack.c.b16 %v583, %v581
    %v748 = vpack.c.b16 %v584, %v582
    %v749 = vpack.c.b16 %v587, %v585
    %v750 = vpack.c.b16 %v588, %v586
    %v751 = vpack.c.b16 %v591, %v589
    %v752 = vpack.c.b16 %v592, %v590
    %v753 = vpack.c.b16 %v595, %v593
    %v754 = vpack.c.b16 %v596, %v594
    %v755 = vpack.c.b16 %v599, %v597
    %v756 = vpack.c.b16 %v600, %v598
    %v757 = vpack.c.b16 %v603, %v601
    %v758 = vpack.c.b16 %v604, %v602
    %v759 = vpack.c.b16 %v607, %v605
    %v760 = vpack.c.b16 %v608, %v606
    %v761 = vpack.c.b16 %v611, %v609
    %v762 = vpack.c.b16 %v612, %v610
    %v763 = vpack.c.b16 %v615, %v613
    %v764 = vpack.c.b16 %v616, %v614
    %v765 = vpack.c.b16 %v619, %v617
    %v766 = vpack.c.b16 %v620, %v618
    %v767 = vpack.c.b16 %v623, %v621
    %v768 = vpack.c.b16 %v624, %v622
    %v769 = vpack.c.b16 %v627, %v625
    %v770 = vpack.c.b16 %v628, %v626
    %v771 = vpack.c.b16 %v631, %v629
    %v772 = vpack.c.b16 %v632, %v630
    %v773 = vpack.c.b16 %v635, %v633
    %v774 = vpack.c.b16 %v636, %v634
    %v775 = vpack.c.b16 %v639, %v637
    %v776 = vpack.c.b16 %v640, %v638
    %v777 = vpack.c.b16 %v643, %v641
    %v778 = vpack.c.b16 %v644, %v642
    %v779 = vpack.c.b16 %v647, %v645
    %v780 = vpack.c.b16 %v648, %v646
    %v781 = vpack.c.b16 %v651, %v649
    %v782 = vpack.c.b16 %v652, %v650
    %v783 = vpack.c.b16 %v655, %v653
    %v784 = vpack.c.b16 %v656, %v654
    %913 = vmatpush.bf16.msra.mxu0 %v671
    %914 = vmatpush.bf16.msra.mxu0 %v669
    %915 = vmatpush.bf16.msra.mxu0 %v667
    %916 = vmatpush.bf16.msra.mxu0 %v665
    %917 = vmatpush.bf16.msra.mxu0 %v663
    %918 = vmatpush.bf16.msra.mxu0 %v661
    %919 = vmatpush.bf16.msra.mxu0 %v659
    %920 = vmatpush.bf16.msra.mxu0 %v657
    %921 = vmatmul.bf16.gmra.mxu0 %v257
    %v922 = vpop.f32.mrf.mxu0
    %v923 = vadd.f32 %v241, %v922
    %v924 = vpop.f32.mrf.mxu0
    %925 = vdwg.mxu0
    %926 = vmatpush.bf16.msra.mxu0 %v687
    %927 = vmatpush.bf16.msra.mxu0 %v685
    %928 = vmatpush.bf16.msra.mxu0 %v683
    %929 = vmatpush.bf16.msra.mxu0 %v681
    %930 = vmatpush.bf16.msra.mxu0 %v679
    %931 = vmatpush.bf16.msra.mxu0 %v677
    %932 = vmatpush.bf16.msra.mxu0 %v675
    %933 = vmatpush.bf16.msra.mxu0 %v673
    %934 = vmatmul.bf16.gmra.mxu0 %v258
    %v935 = vpop.f32.mrf.mxu0
    %v936 = vadd.f32 %v923, %v935
    %v937 = vpop.f32.mrf.mxu0
    %938 = vdwg.mxu0
    %939 = vmatpush.bf16.msra.mxu0 %v703
    %940 = vmatpush.bf16.msra.mxu0 %v701
    %941 = vmatpush.bf16.msra.mxu0 %v699
    %942 = vmatpush.bf16.msra.mxu0 %v697
    %943 = vmatpush.bf16.msra.mxu0 %v695
    %944 = vmatpush.bf16.msra.mxu0 %v693
    %945 = vmatpush.bf16.msra.mxu0 %v691
    %946 = vmatpush.bf16.msra.mxu0 %v689
    %947 = vmatmul.bf16.gmra.mxu0 %v259
    %v948 = vpop.f32.mrf.mxu0
    %v949 = vadd.f32 %v936, %v948
    %v950 = vpop.f32.mrf.mxu0
    %951 = vdwg.mxu0
    %952 = vmatpush.bf16.msra.mxu0 %v719
    %953 = vmatpush.bf16.msra.mxu0 %v717
    %954 = vmatpush.bf16.msra.mxu0 %v715
    %955 = vmatpush.bf16.msra.mxu0 %v713
    %956 = vmatpush.bf16.msra.mxu0 %v711
    %957 = vmatpush.bf16.msra.mxu0 %v709
    %958 = vmatpush.bf16.msra.mxu0 %v707
    %959 = vmatpush.bf16.msra.mxu0 %v705
    %960 = vmatmul.bf16.gmra.mxu0 %v260
    %v961 = vpop.f32.mrf.mxu0
    %v962 = vadd.f32 %v949, %v961
    %v963 = vpop.f32.mrf.mxu0
    %964 = vdwg.mxu0
    %965 = vmatpush.bf16.msra.mxu0 %v735
    %966 = vmatpush.bf16.msra.mxu0 %v733
    %967 = vmatpush.bf16.msra.mxu0 %v731
    %968 = vmatpush.bf16.msra.mxu0 %v729
    %969 = vmatpush.bf16.msra.mxu0 %v727
    %970 = vmatpush.bf16.msra.mxu0 %v725
    %971 = vmatpush.bf16.msra.mxu0 %v723
    %972 = vmatpush.bf16.msra.mxu0 %v721
    %973 = vmatmul.bf16.gmra.mxu0 %v261
    %v974 = vpop.f32.mrf.mxu0
    %v975 = vadd.f32 %v962, %v974
    %v976 = vpop.f32.mrf.mxu0
    %977 = vdwg.mxu0
    %978 = vmatpush.bf16.msra.mxu0 %v751
    %979 = vmatpush.bf16.msra.mxu0 %v749
    %980 = vmatpush.bf16.msra.mxu0 %v747
    %981 = vmatpush.bf16.msra.mxu0 %v745
    %982 = vmatpush.bf16.msra.mxu0 %v743
    %983 = vmatpush.bf16.msra.mxu0 %v741
    %984 = vmatpush.bf16.msra.mxu0 %v739
    %985 = vmatpush.bf16.msra.mxu0 %v737
    %986 = vmatmul.bf16.gmra.mxu0 %v262
    %v987 = vpop.f32.mrf.mxu0
    %v988 = vadd.f32 %v975, %v987
    %v989 = vpop.f32.mrf.mxu0
    %990 = vdwg.mxu0
    %991 = vmatpush.bf16.msra.mxu0 %v767
    %992 = vmatpush.bf16.msra.mxu0 %v765
    %993 = vmatpush.bf16.msra.mxu0 %v763
    %994 = vmatpush.bf16.msra.mxu0 %v761
    %995 = vmatpush.bf16.msra.mxu0 %v759
    %996 = vmatpush.bf16.msra.mxu0 %v757
    %997 = vmatpush.bf16.msra.mxu0 %v755
    %998 = vmatpush.bf16.msra.mxu0 %v753
    %999 = vmatmul.bf16.gmra.mxu0 %v263
    %v1000 = vpop.f32.mrf.mxu0
    %v1001 = vadd.f32 %v988, %v1000
    %v1002 = vpop.f32.mrf.mxu0
    %1003 = vdwg.mxu0
    %1004 = vmatpush.bf16.msra.mxu0 %v783
    %1005 = vmatpush.bf16.msra.mxu0 %v781
    %1006 = vmatpush.bf16.msra.mxu0 %v779
    %1007 = vmatpush.bf16.msra.mxu0 %v777
    %1008 = vmatpush.bf16.msra.mxu0 %v775
    %1009 = vmatpush.bf16.msra.mxu0 %v773
    %1010 = vmatpush.bf16.msra.mxu0 %v771
    %1011 = vmatpush.bf16.msra.mxu0 %v769
    %1012 = vmatmul.bf16.gmra.mxu0 %v264
    %v1013 = vpop.f32.mrf.mxu0
    %v1014 = vadd.f32 %v1001, %v1013
    %v1015 = vpop.f32.mrf.mxu0
    %1016 = vdwg.mxu0
    %1017 = vmatpush.bf16.msra.mxu0 %v672
    %1018 = vmatpush.bf16.msra.mxu0 %v670
    %1019 = vmatpush.bf16.msra.mxu0 %v668
    %1020 = vmatpush.bf16.msra.mxu0 %v666
    %1021 = vmatpush.bf16.msra.mxu0 %v664
    %1022 = vmatpush.bf16.msra.mxu0 %v662
    %1023 = vmatpush.bf16.msra.mxu0 %v660
    %1024 = vmatpush.bf16.msra.mxu0 %v658
    %1025 = vmatmul.bf16.gmra.mxu0 %v257
    %v1026 = vpop.f32.mrf.mxu0
    %v1027 = vadd.f32 %v242, %v1026
    %v1028 = vpop.f32.mrf.mxu0
    %1029 = vdwg.mxu0
    %1030 = vmatpush.bf16.msra.mxu0 %v688
    %1031 = vmatpush.bf16.msra.mxu0 %v686
    %1032 = vmatpush.bf16.msra.mxu0 %v684
    %1033 = vmatpush.bf16.msra.mxu0 %v682
    %1034 = vmatpush.bf16.msra.mxu0 %v680
    %1035 = vmatpush.bf16.msra.mxu0 %v678
    %1036 = vmatpush.bf16.msra.mxu0 %v676
    %1037 = vmatpush.bf16.msra.mxu0 %v674
    %1038 = vmatmul.bf16.gmra.mxu0 %v258
    %v1039 = vpop.f32.mrf.mxu0
    %v1040 = vadd.f32 %v1027, %v1039
    %v1041 = vpop.f32.mrf.mxu0
    %1042 = vdwg.mxu0
    %1043 = vmatpush.bf16.msra.mxu0 %v704
    %1044 = vmatpush.bf16.msra.mxu0 %v702
    %1045 = vmatpush.bf16.msra.mxu0 %v700
    %1046 = vmatpush.bf16.msra.mxu0 %v698
    %1047 = vmatpush.bf16.msra.mxu0 %v696
    %1048 = vmatpush.bf16.msra.mxu0 %v694
    %1049 = vmatpush.bf16.msra.mxu0 %v692
    %1050 = vmatpush.bf16.msra.mxu0 %v690
    %1051 = vmatmul.bf16.gmra.mxu0 %v259
    %v1052 = vpop.f32.mrf.mxu0
    %v1053 = vadd.f32 %v1040, %v1052
    %v1054 = vpop.f32.mrf.mxu0
    %1055 = vdwg.mxu0
    %1056 = vmatpush.bf16.msra.mxu0 %v720
    %1057 = vmatpush.bf16.msra.mxu0 %v718
    %1058 = vmatpush.bf16.msra.mxu0 %v716
    %1059 = vmatpush.bf16.msra.mxu0 %v714
    %1060 = vmatpush.bf16.msra.mxu0 %v712
    %1061 = vmatpush.bf16.msra.mxu0 %v710
    %1062 = vmatpush.bf16.msra.mxu0 %v708
    %1063 = vmatpush.bf16.msra.mxu0 %v706
    %1064 = vmatmul.bf16.gmra.mxu0 %v260
    %v1065 = vpop.f32.mrf.mxu0
    %v1066 = vadd.f32 %v1053, %v1065
    %v1067 = vpop.f32.mrf.mxu0
    %1068 = vdwg.mxu0
    %1069 = vmatpush.bf16.msra.mxu0 %v736
    %1070 = vmatpush.bf16.msra.mxu0 %v734
    %1071 = vmatpush.bf16.msra.mxu0 %v732
    %1072 = vmatpush.bf16.msra.mxu0 %v730
    %1073 = vmatpush.bf16.msra.mxu0 %v728
    %1074 = vmatpush.bf16.msra.mxu0 %v726
    %1075 = vmatpush.bf16.msra.mxu0 %v724
    %1076 = vmatpush.bf16.msra.mxu0 %v722
    %1077 = vmatmul.bf16.gmra.mxu0 %v261
    %v1078 = vpop.f32.mrf.mxu0
    %v1079 = vadd.f32 %v1066, %v1078
    %v1080 = vpop.f32.mrf.mxu0
    %1081 = vdwg.mxu0
    %1082 = vmatpush.bf16.msra.mxu0 %v752
    %1083 = vmatpush.bf16.msra.mxu0 %v750
    %1084 = vmatpush.bf16.msra.mxu0 %v748
    %1085 = vmatpush.bf16.msra.mxu0 %v746
    %1086 = vmatpush.bf16.msra.mxu0 %v744
    %1087 = vmatpush.bf16.msra.mxu0 %v742
    %1088 = vmatpush.bf16.msra.mxu0 %v740
    %1089 = vmatpush.bf16.msra.mxu0 %v738
    %1090 = vmatmul.bf16.gmra.mxu0 %v262
    %v1091 = vpop.f32.mrf.mxu0
    %v1092 = vadd.f32 %v1079, %v1091
    %v1093 = vpop.f32.mrf.mxu0
    %1094 = vdwg.mxu0
    %1095 = vmatpush.bf16.msra.mxu0 %v768
    %1096 = vmatpush.bf16.msra.mxu0 %v766
    %1097 = vmatpush.bf16.msra.mxu0 %v764
    %1098 = vmatpush.bf16.msra.mxu0 %v762
    %1099 = vmatpush.bf16.msra.mxu0 %v760
    %1100 = vmatpush.bf16.msra.mxu0 %v758
    %1101 = vmatpush.bf16.msra.mxu0 %v756
    %1102 = vmatpush.bf16.msra.mxu0 %v754
    %1103 = vmatmul.bf16.gmra.mxu0 %v263
    %v1104 = vpop.f32.mrf.mxu0
    %v1105 = vadd.f32 %v1092, %v1104
    %v1106 = vpop.f32.mrf.mxu0
    %1107 = vdwg.mxu0
    %1108 = vmatpush.bf16.msra.mxu0 %v784
    %1109 = vmatpush.bf16.msra.mxu0 %v782
    %1110 = vmatpush.bf16.msra.mxu0 %v780
    %1111 = vmatpush.bf16.msra.mxu0 %v778
    %1112 = vmatpush.bf16.msra.mxu0 %v776
    %1113 = vmatpush.bf16.msra.mxu0 %v774
    %1114 = vmatpush.bf16.msra.mxu0 %v772
    %1115 = vmatpush.bf16.msra.mxu0 %v770
    %1116 = vmatmul.bf16.gmra.mxu0 %v264
    %v1117 = vpop.f32.mrf.mxu0
    %v1118 = vadd.f32 %v1105, %v1117
    %v1119 = vpop.f32.mrf.mxu0
    %1120 = vdwg.mxu0
    %v1121 = vmul.f32 %v1014, 0.01
    %v1122 = vmul.f32 %v1118, 0.01
    %v1123 = vmax.f32 %v1014, %v1121
    %v1124 = vmax.f32 %v1118, %v1122
    %v1125 = vpack.c.bf16 %v1123, %v1123
    %v1126 = vpack.c.bf16 %v1124, %v1124
    %v1127 = vld [vmem:[%s3] sm:$0xf]
    %v1128 = vld [vmem:[%s3 + $0x4] sm:$0xf]
    %v1129 = vld [vmem:[%s3 + $0x8] sm:$0xf]
    %v1130 = vld [vmem:[%s3 + $0xc] sm:$0xf]
    %v1131 = vld [vmem:[%s3 + $0x10] sm:$0xf]
    %v1132 = vld [vmem:[%s3 + $0x14] sm:$0xf]
    %v1133 = vld [vmem:[%s3 + $0x18] sm:$0xf]
    %v1134 = vld [vmem:[%s3 + $0x1c] sm:$0xf]
    %v1135 = vld [vmem:[%s3 + $0x20] sm:$0xf]
    %v1136 = vld [vmem:[%s3 + $0x24] sm:$0xf]
    %v1137 = vld [vmem:[%s3 + $0x28] sm:$0xf]
    %v1138 = vld [vmem:[%s3 + $0x2c] sm:$0xf]
    %v1139 = vld [vmem:[%s3 + $0x30] sm:$0xf]
    %v1140 = vld [vmem:[%s3 + $0x34] sm:$0xf]
    %v1141 = vld [vmem:[%s3 + $0x38] sm:$0xf]
    %v1142 = vld [vmem:[%s3 + $0x3c] sm:$0xf]
    %v1143 = vld [vmem:[%s3 + $0x40] sm:$0xf]
    %v1144 = vld [vmem:[%s3 + $0x44] sm:$0xf]
    %v1145 = vld [vmem:[%s3 + $0x48] sm:$0xf]
    %v1146 = vld [vmem:[%s3 + $0x4c] sm:$0xf]
    %v1147 = vld [vmem:[%s3 + $0x50] sm:$0xf]
    %v1148 = vld [vmem:[%s3 + $0x54] sm:$0xf]
    %v1149 = vld [vmem:[%s3 + $0x58] sm:$0xf]
    %v1150 = vld [vmem:[%s3 + $0x5c] sm:$0xf]
    %v1151 = vld [vmem:[%s3 + $0x60] sm:$0xf]
    %v1152 = vld [vmem:[%s3 + $0x64] sm:$0xf]
    %v1153 = vld [vmem:[%s3 + $0x68] sm:$0xf]
    %v1154 = vld [vmem:[%s3 + $0x6c] sm:$0xf]
    %v1155 = vld [vmem:[%s3 + $0x70] sm:$0xf]
    %v1156 = vld [vmem:[%s3 + $0x74] sm:$0xf]
    %v1157 = vld [vmem:[%s3 + $0x78] sm:$0xf]
    %v1158 = vld [vmem:[%s3 + $0x7c] sm:$0xf]
    %v1159 = vld [vmem:[%s4] sm:$0x1]
    %v1161 = vperm.slane %v1159, 0
    %v1195 = vunpack.c.l.b16 %v1127
    %v1196 = vunpack.c.l.b16 %v1128
    %v1197 = vunpack.c.l.b16 %v1129
    %v1198 = vunpack.c.l.b16 %v1130
    %v1199 = vunpack.c.l.b16 %v1131
    %v1200 = vunpack.c.l.b16 %v1132
    %v1201 = vunpack.c.l.b16 %v1133
    %v1202 = vunpack.c.l.b16 %v1134
    %v1203 = vunpack.c.l.b16 %v1135
    %v1204 = vunpack.c.l.b16 %v1136
    %v1205 = vunpack.c.l.b16 %v1137
    %v1206 = vunpack.c.l.b16 %v1138
    %v1207 = vunpack.c.l.b16 %v1139
    %v1208 = vunpack.c.l.b16 %v1140
    %v1209 = vunpack.c.l.b16 %v1141
    %v1210 = vunpack.c.l.b16 %v1142
    %v1211 = vunpack.c.l.b16 %v1143
    %v1212 = vunpack.c.l.b16 %v1144
    %v1213 = vunpack.c.l.b16 %v1145
    %v1214 = vunpack.c.l.b16 %v1146
    %v1215 = vunpack.c.l.b16 %v1147
    %v1216 = vunpack.c.l.b16 %v1148
    %v1217 = vunpack.c.l.b16 %v1149
    %v1218 = vunpack.c.l.b16 %v1150
    %v1219 = vunpack.c.l.b16 %v1151
    %v1220 = vunpack.c.l.b16 %v1152
    %v1221 = vunpack.c.l.b16 %v1153
    %v1222 = vunpack.c.l.b16 %v1154
    %v1223 = vunpack.c.l.b16 %v1155
    %v1224 = vunpack.c.l.b16 %v1156
    %v1225 = vunpack.c.l.b16 %v1157
    %v1226 = vunpack.c.l.b16 %v1158
    %v1227 = vpack.c.b16 %v1196, %v1195
    %v1228 = vpack.c.b16 %v1198, %v1197
    %v1229 = vpack.c.b16 %v1200, %v1199
    %v1230 = vpack.c.b16 %v1202, %v1201
    %v1231 = vpack.c.b16 %v1204, %v1203
    %v1232 = vpack.c.b16 %v1206, %v1205
    %v1233 = vpack.c.b16 %v1208, %v1207
    %v1234 = vpack.c.b16 %v1210, %v1209
    %v1235 = vpack.c.b16 %v1212, %v1211
    %v1236 = vpack.c.b16 %v1214, %v1213
    %v1237 = vpack.c.b16 %v1216, %v1215
    %v1238 = vpack.c.b16 %v1218, %v1217
    %v1239 = vpack.c.b16 %v1220, %v1219
    %v1240 = vpack.c.b16 %v1222, %v1221
    %v1241 = vpack.c.b16 %v1224, %v1223
    %v1242 = vpack.c.b16 %v1226, %v1225
    %1259 = vmatpush.bf16.msra.mxu0 %v1234
    %1260 = vmatpush.bf16.msra.mxu0 %v1233
    %1261 = vmatpush.bf16.msra.mxu0 %v1232
    %1262 = vmatpush.bf16.msra.mxu0 %v1231
    %1263 = vmatpush.bf16.msra.mxu0 %v1230
    %1264 = vmatpush.bf16.msra.mxu0 %v1229
    %1265 = vmatpush.bf16.msra.mxu0 %v1228
    %1266 = vmatpush.bf16.msra.mxu0 %v1227
    %1267 = vmatmul.bf16.gmra.mxu0 %v1125
    %v1268 = vpop.f32.mrf.mxu0
    %v1269 = vadd.f32 %v1161, %v1268
    %v1270 = vpop.f32.mrf.mxu0
    %1271 = vdwg.mxu0
    %1272 = vmatpush.bf16.msra.mxu0 %v1242
    %1273 = vmatpush.bf16.msra.mxu0 %v1241
    %1274 = vmatpush.bf16.msra.mxu0 %v1240
    %1275 = vmatpush.bf16.msra.mxu0 %v1239
    %1276 = vmatpush.bf16.msra.mxu0 %v1238
    %1277 = vmatpush.bf16.msra.mxu0 %v1237
    %1278 = vmatpush.bf16.msra.mxu0 %v1236
    %1279 = vmatpush.bf16.msra.mxu0 %v1235
    %1280 = vmatmul.bf16.gmra.mxu0 %v1126
    %v1281 = vpop.f32.mrf.mxu0
    %v1282 = vadd.f32 %v1269, %v1281
    %v1283 = vpop.f32.mrf.mxu0
    %1284 = vdwg.mxu0
    %v1285 = vmul.f32 %v1282, 0.01
    %v1286 = vmax.f32 %v1282, %v1285
    %v1287 = vpack.c.bf16 %v1286, %v1286
    %v1288 = vld [vmem:[#allocation4] sm:$0xf]
    %v1289 = vld [vmem:[#allocation4 + $0x4] sm:$0xf]
    %v1290 = vld [vmem:[#allocation4 + $0x8] sm:$0xf]
    %v1291 = vld [vmem:[#allocation4 + $0xc] sm:$0xf]
    %v1292 = vld [vmem:[#allocation4 + $0x10] sm:$0xf]
    %v1293 = vld [vmem:[#allocation4 + $0x14] sm:$0xf]
    %v1294 = vld [vmem:[#allocation4 + $0x18] sm:$0xf]
    %v1295 = vld [vmem:[#allocation4 + $0x1c] sm:$0xf]
    %v1296 = vld [vmem:[#allocation4 + $0x20] sm:$0xf]
    %v1297 = vld [vmem:[#allocation4 + $0x24] sm:$0xf]
    %v1298 = vld [vmem:[#allocation4 + $0x28] sm:$0xf]
    %v1299 = vld [vmem:[#allocation4 + $0x2c] sm:$0xf]
    %v1300 = vld [vmem:[#allocation4 + $0x30] sm:$0xf]
    %v1301 = vld [vmem:[#allocation4 + $0x34] sm:$0xf]
    %v1302 = vld [vmem:[#allocation4 + $0x38] sm:$0xf]
    %v1303 = vld [vmem:[#allocation4 + $0x3c] sm:$0xf]
    %v1304 = vld [vmem:[%s6] sm:$0x1]
    %v1306 = vperm.slane %v1304, 0
    %v1324 = vunpack.c.l.b16 %v1288
    %v1325 = vunpack.c.l.b16 %v1289
    %v1326 = vunpack.c.l.b16 %v1290
    %v1327 = vunpack.c.l.b16 %v1291
    %v1328 = vunpack.c.l.b16 %v1292
    %v1329 = vunpack.c.l.b16 %v1293
    %v1330 = vunpack.c.l.b16 %v1294
    %v1331 = vunpack.c.l.b16 %v1295
    %v1332 = vunpack.c.l.b16 %v1296
    %v1333 = vunpack.c.l.b16 %v1297
    %v1334 = vunpack.c.l.b16 %v1298
    %v1335 = vunpack.c.l.b16 %v1299
    %v1336 = vunpack.c.l.b16 %v1300
    %v1337 = vunpack.c.l.b16 %v1301
    %v1338 = vunpack.c.l.b16 %v1302
    %v1339 = vunpack.c.l.b16 %v1303
    %v1340 = vpack.c.b16 %v1325, %v1324
    %v1341 = vpack.c.b16 %v1327, %v1326
    %v1342 = vpack.c.b16 %v1329, %v1328
    %v1343 = vpack.c.b16 %v1331, %v1330
    %v1344 = vpack.c.b16 %v1333, %v1332
    %v1345 = vpack.c.b16 %v1335, %v1334
    %v1346 = vpack.c.b16 %v1337, %v1336
    %v1347 = vpack.c.b16 %v1339, %v1338
    %1356 = vmatpush.bf16.msra.mxu0 %v1347
    %1357 = vmatpush.bf16.msra.mxu0 %v1346
    %1358 = vmatpush.bf16.msra.mxu0 %v1345
    %1359 = vmatpush.bf16.msra.mxu0 %v1344
    %1360 = vmatpush.bf16.msra.mxu0 %v1343
    %1361 = vmatpush.bf16.msra.mxu0 %v1342
    %1362 = vmatpush.bf16.msra.mxu0 %v1341
    %1363 = vmatpush.bf16.msra.mxu0 %v1340
    %1364 = vmatmul.bf16.gmra.mxu0 %v1287
    %v1365 = vpop.f32.mrf.mxu0
    %v1366 = vadd.f32 %v1306, %v1365
    %v1367 = vpop.f32.mrf.mxu0
    %1368 = vdwg.mxu0
    %v1369 = vpack.c.bf16 %v1366, %v1366
    %v1370 = vld [vmem:[#allocation6] sm:$0xf]
    %v1371 = vld [vmem:[#allocation6 + $0x4] sm:$0xf]
    %v1372 = vld [vmem:[#allocation6 + $0x8] sm:$0xf]
    %v1373 = vld [vmem:[#allocation6 + $0xc] sm:$0xf]
    %v1374 = vld [vmem:[#allocation6 + $0x10] sm:$0xf]
    %v1375 = vld [vmem:[#allocation6 + $0x14] sm:$0xf]
    %v1376 = vld [vmem:[#allocation6 + $0x18] sm:$0xf]
    %v1377 = vld [vmem:[#allocation6 + $0x1c] sm:$0xf]
    %v1378 = vld [vmem:[#allocation6 + $0x20] sm:$0xf]
    %v1379 = vld [vmem:[#allocation6 + $0x24] sm:$0xf]
    %v1380 = vld [vmem:[#allocation6 + $0x28] sm:$0xf]
    %v1381 = vld [vmem:[#allocation6 + $0x2c] sm:$0xf]
    %v1382 = vld [vmem:[#allocation6 + $0x30] sm:$0xf]
    %v1383 = vld [vmem:[#allocation6 + $0x34] sm:$0xf]
    %v1384 = vld [vmem:[#allocation6 + $0x38] sm:$0xf]
    %v1385 = vld [vmem:[#allocation6 + $0x3c] sm:$0xf]
    %v1386 = vld [vmem:[%s8] sm:$0x1]
    %v1388 = vperm.slane %v1386, 0
    %v1406 = vunpack.c.l.b16 %v1370
    %v1407 = vunpack.c.l.b16 %v1371
    %v1408 = vunpack.c.l.b16 %v1372
    %v1409 = vunpack.c.l.b16 %v1373
    %v1410 = vunpack.c.l.b16 %v1374
    %v1411 = vunpack.c.l.b16 %v1375
    %v1412 = vunpack.c.l.b16 %v1376
    %v1413 = vunpack.c.l.b16 %v1377
    %v1414 = vunpack.c.l.b16 %v1378
    %v1415 = vunpack.c.l.b16 %v1379
    %v1416 = vunpack.c.l.b16 %v1380
    %v1417 = vunpack.c.l.b16 %v1381
    %v1418 = vunpack.c.l.b16 %v1382
    %v1419 = vunpack.c.l.b16 %v1383
    %v1420 = vunpack.c.l.b16 %v1384
    %v1421 = vunpack.c.l.b16 %v1385
    %v1422 = vpack.c.b16 %v1407, %v1406
    %v1423 = vpack.c.b16 %v1409, %v1408
    %v1424 = vpack.c.b16 %v1411, %v1410
    %v1425 = vpack.c.b16 %v1413, %v1412
    %v1426 = vpack.c.b16 %v1415, %v1414
    %v1427 = vpack.c.b16 %v1417, %v1416
    %v1428 = vpack.c.b16 %v1419, %v1418
    %v1429 = vpack.c.b16 %v1421, %v1420
    %1438 = vmatpush.bf16.msra.mxu0 %v1429
    %1439 = vmatpush.bf16.msra.mxu0 %v1428
    %1440 = vmatpush.bf16.msra.mxu0 %v1427
    %1441 = vmatpush.bf16.msra.mxu0 %v1426
    %1442 = vmatpush.bf16.msra.mxu0 %v1425
    %1443 = vmatpush.bf16.msra.mxu0 %v1424
    %1444 = vmatpush.bf16.msra.mxu0 %v1423
    %1445 = vmatpush.bf16.msra.mxu0 %v1422
    %1446 = vmatmul.bf16.gmra.mxu0 %v1369
    %v1447 = vpop.f32.mrf.mxu0
    %v1448 = vadd.f32 %v1388, %v1447
    %v1449 = vpop.f32.mrf.mxu0
    %1450 = vdwg.mxu0
    %v1451 = vmul.f32 %v1448, 0.01
    %v1452 = vmax.f32 %v1448, %v1451
    %v1453 = vpack.c.bf16 %v1452, %v1452
    %v1454 = vld [vmem:[%s9] sm:$0xff]
    %v1455 = vld [vmem:[%s9 + $0x8] sm:$0xff]
    %v1456 = vld [vmem:[%s9 + $0x10] sm:$0xff]
    %v1457 = vld [vmem:[%s9 + $0x18] sm:$0xff]
    %v1458 = vld [vmem:[%s9 + $0x20] sm:$0xff]
    %v1459 = vld [vmem:[%s9 + $0x28] sm:$0xff]
    %v1460 = vld [vmem:[%s9 + $0x30] sm:$0xff]
    %v1461 = vld [vmem:[%s9 + $0x38] sm:$0xff]
    %v1462 = vld [vmem:[%s9 + $0x40] sm:$0xff]
    %v1463 = vld [vmem:[%s9 + $0x48] sm:$0xff]
    %v1464 = vld [vmem:[%s9 + $0x50] sm:$0xff]
    %v1465 = vld [vmem:[%s9 + $0x58] sm:$0xff]
    %v1466 = vld [vmem:[%s9 + $0x60] sm:$0xff]
    %v1467 = vld [vmem:[%s9 + $0x68] sm:$0xff]
    %v1468 = vld [vmem:[%s9 + $0x70] sm:$0xff]
    %v1469 = vld [vmem:[%s9 + $0x78] sm:$0xff]
    %v1470 = vld [vmem:[%s10] sm:$0x3]
    %v1472 = vperm.slane %v1470, 0
    %v1473 = vperm.slane %v1470, 1
    %v1492 = vunpack.c.l.b16 %v1454
    %v1493 = vunpack.c.h.b16 %v1454
    %v1494 = vunpack.c.l.b16 %v1455
    %v1495 = vunpack.c.h.b16 %v1455
    %v1496 = vunpack.c.l.b16 %v1456
    %v1497 = vunpack.c.h.b16 %v1456
    %v1498 = vunpack.c.l.b16 %v1457
    %v1499 = vunpack.c.h.b16 %v1457
    %v1500 = vunpack.c.l.b16 %v1458
    %v1501 = vunpack.c.h.b16 %v1458
    %v1502 = vunpack.c.l.b16 %v1459
    %v1503 = vunpack.c.h.b16 %v1459
    %v1504 = vunpack.c.l.b16 %v1460
    %v1505 = vunpack.c.h.b16 %v1460
    %v1506 = vunpack.c.l.b16 %v1461
    %v1507 = vunpack.c.h.b16 %v1461
    %v1508 = vunpack.c.l.b16 %v1462
    %v1509 = vunpack.c.h.b16 %v1462
    %v1510 = vunpack.c.l.b16 %v1463
    %v1511 = vunpack.c.h.b16 %v1463
    %v1512 = vunpack.c.l.b16 %v1464
    %v1513 = vunpack.c.h.b16 %v1464
    %v1514 = vunpack.c.l.b16 %v1465
    %v1515 = vunpack.c.h.b16 %v1465
    %v1516 = vunpack.c.l.b16 %v1466
    %v1517 = vunpack.c.h.b16 %v1466
    %v1518 = vunpack.c.l.b16 %v1467
    %v1519 = vunpack.c.h.b16 %v1467
    %v1520 = vunpack.c.l.b16 %v1468
    %v1521 = vunpack.c.h.b16 %v1468
    %v1522 = vunpack.c.l.b16 %v1469
    %v1523 = vunpack.c.h.b16 %v1469
    %v1524 = vpack.c.b16 %v1494, %v1492
    %v1525 = vpack.c.b16 %v1495, %v1493
    %v1526 = vpack.c.b16 %v1498, %v1496
    %v1527 = vpack.c.b16 %v1499, %v1497
    %v1528 = vpack.c.b16 %v1502, %v1500
    %v1529 = vpack.c.b16 %v1503, %v1501
    %v1530 = vpack.c.b16 %v1506, %v1504
    %v1531 = vpack.c.b16 %v1507, %v1505
    %v1532 = vpack.c.b16 %v1510, %v1508
    %v1533 = vpack.c.b16 %v1511, %v1509
    %v1534 = vpack.c.b16 %v1514, %v1512
    %v1535 = vpack.c.b16 %v1515, %v1513
    %v1536 = vpack.c.b16 %v1518, %v1516
    %v1537 = vpack.c.b16 %v1519, %v1517
    %v1538 = vpack.c.b16 %v1522, %v1520
    %v1539 = vpack.c.b16 %v1523, %v1521
    %1556 = vmatpush.bf16.msra.mxu0 %v1538
    %1557 = vmatpush.bf16.msra.mxu0 %v1536
    %1558 = vmatpush.bf16.msra.mxu0 %v1534
    %1559 = vmatpush.bf16.msra.mxu0 %v1532
    %1560 = vmatpush.bf16.msra.mxu0 %v1530
    %1561 = vmatpush.bf16.msra.mxu0 %v1528
    %1562 = vmatpush.bf16.msra.mxu0 %v1526
    %1563 = vmatpush.bf16.msra.mxu0 %v1524
    %1564 = vmatmul.bf16.gmra.mxu0 %v1453
    %v1565 = vpop.f32.mrf.mxu0
    %v1566 = vadd.f32 %v1472, %v1565
    %v1567 = vpop.f32.mrf.mxu0
    %1568 = vdwg.mxu0
    %1569 = vmatpush.bf16.msra.mxu0 %v1539
    %1570 = vmatpush.bf16.msra.mxu0 %v1537
    %1571 = vmatpush.bf16.msra.mxu0 %v1535
    %1572 = vmatpush.bf16.msra.mxu0 %v1533
    %1573 = vmatpush.bf16.msra.mxu0 %v1531
    %1574 = vmatpush.bf16.msra.mxu0 %v1529
    %1575 = vmatpush.bf16.msra.mxu0 %v1527
    %1576 = vmatpush.bf16.msra.mxu0 %v1525
    %1577 = vmatmul.bf16.gmra.mxu0 %v1453
    %v1578 = vpop.f32.mrf.mxu0
    %v1579 = vadd.f32 %v1473, %v1578
    %v1580 = vpop.f32.mrf.mxu0
    %1581 = vdwg.mxu0
    %v1582 = vmul.f32 %v1566, 0.01
    %v1583 = vmul.f32 %v1579, 0.01
    %v1584 = vmax.f32 %v1566, %v1582
    %v1585 = vmax.f32 %v1579, %v1583
    %v1586 = vpack.c.bf16 %v1584, %v1584
    %v1587 = vpack.c.bf16 %v1585, %v1585
    %v1588 = vld [vmem:[#allocation7] sm:$0xff]
    %v1589 = vld [vmem:[#allocation7 + $0x8] sm:$0xff]
    %v1590 = vld [vmem:[#allocation7 + $0x10] sm:$0xff]
    %v1591 = vld [vmem:[#allocation7 + $0x18] sm:$0xff]
    %v1592 = vld [vmem:[#allocation7 + $0x20] sm:$0xff]
    %v1593 = vld [vmem:[#allocation7 + $0x28] sm:$0xff]
    %v1594 = vld [vmem:[#allocation7 + $0x30] sm:$0xff]
    %v1595 = vld [vmem:[#allocation7 + $0x38] sm:$0xff]
    %v1596 = vld [vmem:[#allocation7 + $0x40] sm:$0xff]
    %v1597 = vld [vmem:[#allocation7 + $0x48] sm:$0xff]
    %v1598 = vld [vmem:[#allocation7 + $0x50] sm:$0xff]
    %v1599 = vld [vmem:[#allocation7 + $0x58] sm:$0xff]
    %v1600 = vld [vmem:[#allocation7 + $0x60] sm:$0xff]
    %v1601 = vld [vmem:[#allocation7 + $0x68] sm:$0xff]
    %v1602 = vld [vmem:[#allocation7 + $0x70] sm:$0xff]
    %v1603 = vld [vmem:[#allocation7 + $0x78] sm:$0xff]
    %v1604 = vld [vmem:[#allocation7 + $0x80] sm:$0xff]
    %v1605 = vld [vmem:[#allocation7 + $0x88] sm:$0xff]
    %v1606 = vld [vmem:[#allocation7 + $0x90] sm:$0xff]
    %v1607 = vld [vmem:[#allocation7 + $0x98] sm:$0xff]
    %v1608 = vld [vmem:[#allocation7 + $0xa0] sm:$0xff]
    %v1609 = vld [vmem:[#allocation7 + $0xa8] sm:$0xff]
    %v1610 = vld [vmem:[#allocation7 + $0xb0] sm:$0xff]
    %v1611 = vld [vmem:[#allocation7 + $0xb8] sm:$0xff]
    %v1612 = vld [vmem:[#allocation7 + $0xc0] sm:$0xff]
    %v1613 = vld [vmem:[#allocation7 + $0xc8] sm:$0xff]
    %v1614 = vld [vmem:[#allocation7 + $0xd0] sm:$0xff]
    %v1615 = vld [vmem:[#allocation7 + $0xd8] sm:$0xff]
    %v1616 = vld [vmem:[#allocation7 + $0xe0] sm:$0xff]
    %v1617 = vld [vmem:[#allocation7 + $0xe8] sm:$0xff]
    %v1618 = vld [vmem:[#allocation7 + $0xf0] sm:$0xff]
    %v1619 = vld [vmem:[#allocation7 + $0xf8] sm:$0xff]
    %v1620 = vld [vmem:[#allocation7 + $0x100] sm:$0xff]
    %v1621 = vld [vmem:[#allocation7 + $0x108] sm:$0xff]
    %v1622 = vld [vmem:[#allocation7 + $0x110] sm:$0xff]
    %v1623 = vld [vmem:[#allocation7 + $0x118] sm:$0xff]
    %v1624 = vld [vmem:[#allocation7 + $0x120] sm:$0xff]
    %v1625 = vld [vmem:[#allocation7 + $0x128] sm:$0xff]
    %v1626 = vld [vmem:[#allocation7 + $0x130] sm:$0xff]
    %v1627 = vld [vmem:[#allocation7 + $0x138] sm:$0xff]
    %v1628 = vld [vmem:[#allocation7 + $0x140] sm:$0xff]
    %v1629 = vld [vmem:[#allocation7 + $0x148] sm:$0xff]
    %v1630 = vld [vmem:[#allocation7 + $0x150] sm:$0xff]
    %v1631 = vld [vmem:[#allocation7 + $0x158] sm:$0xff]
    %v1632 = vld [vmem:[#allocation7 + $0x160] sm:$0xff]
    %v1633 = vld [vmem:[#allocation7 + $0x168] sm:$0xff]
    %v1634 = vld [vmem:[#allocation7 + $0x170] sm:$0xff]
    %v1635 = vld [vmem:[#allocation7 + $0x178] sm:$0xff]
    %v1636 = vld [vmem:[#allocation7 + $0x180] sm:$0xff]
    %v1637 = vld [vmem:[#allocation7 + $0x188] sm:$0xff]
    %v1638 = vld [vmem:[#allocation7 + $0x190] sm:$0xff]
    %v1639 = vld [vmem:[#allocation7 + $0x198] sm:$0xff]
    %v1640 = vld [vmem:[#allocation7 + $0x1a0] sm:$0xff]
    %v1641 = vld [vmem:[#allocation7 + $0x1a8] sm:$0xff]
    %v1642 = vld [vmem:[#allocation7 + $0x1b0] sm:$0xff]
    %v1643 = vld [vmem:[#allocation7 + $0x1b8] sm:$0xff]
    %v1644 = vld [vmem:[#allocation7 + $0x1c0] sm:$0xff]
    %v1645 = vld [vmem:[#allocation7 + $0x1c8] sm:$0xff]
    %v1646 = vld [vmem:[#allocation7 + $0x1d0] sm:$0xff]
    %v1647 = vld [vmem:[#allocation7 + $0x1d8] sm:$0xff]
    %v1648 = vld [vmem:[#allocation7 + $0x1e0] sm:$0xff]
    %v1649 = vld [vmem:[#allocation7 + $0x1e8] sm:$0xff]
    %v1650 = vld [vmem:[#allocation7 + $0x1f0] sm:$0xff]
    %v1651 = vld [vmem:[#allocation7 + $0x1f8] sm:$0xff]
    %v1652 = vld [vmem:[#allocation7 + $0x200] sm:$0xff]
    %v1653 = vld [vmem:[#allocation7 + $0x208] sm:$0xff]
    %v1654 = vld [vmem:[#allocation7 + $0x210] sm:$0xff]
    %v1655 = vld [vmem:[#allocation7 + $0x218] sm:$0xff]
    %v1656 = vld [vmem:[#allocation7 + $0x220] sm:$0xff]
    %v1657 = vld [vmem:[#allocation7 + $0x228] sm:$0xff]
    %v1658 = vld [vmem:[#allocation7 + $0x230] sm:$0xff]
    %v1659 = vld [vmem:[#allocation7 + $0x238] sm:$0xff]
    %v1660 = vld [vmem:[#allocation7 + $0x240] sm:$0xff]
    %v1661 = vld [vmem:[#allocation7 + $0x248] sm:$0xff]
    %v1662 = vld [vmem:[#allocation7 + $0x250] sm:$0xff]
    %v1663 = vld [vmem:[#allocation7 + $0x258] sm:$0xff]
    %v1664 = vld [vmem:[#allocation7 + $0x260] sm:$0xff]
    %v1665 = vld [vmem:[#allocation7 + $0x268] sm:$0xff]
    %v1666 = vld [vmem:[#allocation7 + $0x270] sm:$0xff]
    %v1667 = vld [vmem:[#allocation7 + $0x278] sm:$0xff]
    %v1668 = vld [vmem:[#allocation7 + $0x280] sm:$0xff]
    %v1669 = vld [vmem:[#allocation7 + $0x288] sm:$0xff]
    %v1670 = vld [vmem:[#allocation7 + $0x290] sm:$0xff]
    %v1671 = vld [vmem:[#allocation7 + $0x298] sm:$0xff]
    %v1672 = vld [vmem:[#allocation7 + $0x2a0] sm:$0xff]
    %v1673 = vld [vmem:[#allocation7 + $0x2a8] sm:$0xff]
    %v1674 = vld [vmem:[#allocation7 + $0x2b0] sm:$0xff]
    %v1675 = vld [vmem:[#allocation7 + $0x2b8] sm:$0xff]
    %v1676 = vld [vmem:[#allocation7 + $0x2c0] sm:$0xff]
    %v1677 = vld [vmem:[#allocation7 + $0x2c8] sm:$0xff]
    %v1678 = vld [vmem:[#allocation7 + $0x2d0] sm:$0xff]
    %v1679 = vld [vmem:[#allocation7 + $0x2d8] sm:$0xff]
    %v1680 = vld [vmem:[#allocation7 + $0x2e0] sm:$0xff]
    %v1681 = vld [vmem:[#allocation7 + $0x2e8] sm:$0xff]
    %v1682 = vld [vmem:[#allocation7 + $0x2f0] sm:$0xff]
    %v1683 = vld [vmem:[#allocation7 + $0x2f8] sm:$0xff]
    %v1684 = vld [vmem:[#allocation7 + $0x300] sm:$0xff]
    %v1685 = vld [vmem:[#allocation7 + $0x308] sm:$0xff]
    %v1686 = vld [vmem:[#allocation7 + $0x310] sm:$0xff]
    %v1687 = vld [vmem:[#allocation7 + $0x318] sm:$0xff]
    %v1688 = vld [vmem:[#allocation7 + $0x320] sm:$0xff]
    %v1689 = vld [vmem:[#allocation7 + $0x328] sm:$0xff]
    %v1690 = vld [vmem:[#allocation7 + $0x330] sm:$0xff]
    %v1691 = vld [vmem:[#allocation7 + $0x338] sm:$0xff]
    %v1692 = vld [vmem:[#allocation7 + $0x340] sm:$0xff]
    %v1693 = vld [vmem:[#allocation7 + $0x348] sm:$0xff]
    %v1694 = vld [vmem:[#allocation7 + $0x350] sm:$0xff]
    %v1695 = vld [vmem:[#allocation7 + $0x358] sm:$0xff]
    %v1696 = vld [vmem:[#allocation7 + $0x360] sm:$0xff]
    %v1697 = vld [vmem:[#allocation7 + $0x368] sm:$0xff]
    %v1698 = vld [vmem:[#allocation7 + $0x370] sm:$0xff]
    %v1699 = vld [vmem:[#allocation7 + $0x378] sm:$0xff]
    %v1700 = vld [vmem:[#allocation7 + $0x380] sm:$0xff]
    %v1701 = vld [vmem:[#allocation7 + $0x388] sm:$0xff]
    %v1702 = vld [vmem:[#allocation7 + $0x390] sm:$0xff]
    %v1703 = vld [vmem:[#allocation7 + $0x398] sm:$0xff]
    %v1704 = vld [vmem:[#allocation7 + $0x3a0] sm:$0xff]
    %v1705 = vld [vmem:[#allocation7 + $0x3a8] sm:$0xff]
    %v1706 = vld [vmem:[#allocation7 + $0x3b0] sm:$0xff]
    %v1707 = vld [vmem:[#allocation7 + $0x3b8] sm:$0xff]
    %v1708 = vld [vmem:[#allocation7 + $0x3c0] sm:$0xff]
    %v1709 = vld [vmem:[#allocation7 + $0x3c8] sm:$0xff]
    %v1710 = vld [vmem:[#allocation7 + $0x3d0] sm:$0xff]
    %v1711 = vld [vmem:[#allocation7 + $0x3d8] sm:$0xff]
    %v1712 = vld [vmem:[#allocation7 + $0x3e0] sm:$0xff]
    %v1713 = vld [vmem:[#allocation7 + $0x3e8] sm:$0xff]
    %v1714 = vld [vmem:[#allocation7 + $0x3f0] sm:$0xff]
    %v1715 = vld [vmem:[#allocation7 + $0x3f8] sm:$0xff]
    %v1716 = vld [vmem:[%s12] sm:$0xff]
    %v1718 = vperm.slane %v1716, 0
    %v1719 = vperm.slane %v1716, 1
    %v1720 = vperm.slane %v1716, 2
    %v1721 = vperm.slane %v1716, 3
    %v1722 = vperm.slane %v1716, 4
    %v1723 = vperm.slane %v1716, 5
    %v1724 = vperm.slane %v1716, 6
    %v1725 = vperm.slane %v1716, 7
    %v1862 = vunpack.c.l.b16 %v1588
    %v1863 = vunpack.c.h.b16 %v1588
    %v1864 = vunpack.c.l.b16 %v1589
    %v1865 = vunpack.c.h.b16 %v1589
    %v1866 = vunpack.c.l.b16 %v1590
    %v1867 = vunpack.c.h.b16 %v1590
    %v1868 = vunpack.c.l.b16 %v1591
    %v1869 = vunpack.c.h.b16 %v1591
    %v1870 = vunpack.c.l.b16 %v1592
    %v1871 = vunpack.c.h.b16 %v1592
    %v1872 = vunpack.c.l.b16 %v1593
    %v1873 = vunpack.c.h.b16 %v1593
    %v1874 = vunpack.c.l.b16 %v1594
    %v1875 = vunpack.c.h.b16 %v1594
    %v1876 = vunpack.c.l.b16 %v1595
    %v1877 = vunpack.c.h.b16 %v1595
    %v1878 = vunpack.c.l.b16 %v1596
    %v1879 = vunpack.c.h.b16 %v1596
    %v1880 = vunpack.c.l.b16 %v1597
    %v1881 = vunpack.c.h.b16 %v1597
    %v1882 = vunpack.c.l.b16 %v1598
    %v1883 = vunpack.c.h.b16 %v1598
    %v1884 = vunpack.c.l.b16 %v1599
    %v1885 = vunpack.c.h.b16 %v1599
    %v1886 = vunpack.c.l.b16 %v1600
    %v1887 = vunpack.c.h.b16 %v1600
    %v1888 = vunpack.c.l.b16 %v1601
    %v1889 = vunpack.c.h.b16 %v1601
    %v1890 = vunpack.c.l.b16 %v1602
    %v1891 = vunpack.c.h.b16 %v1602
    %v1892 = vunpack.c.l.b16 %v1603
    %v1893 = vunpack.c.h.b16 %v1603
    %v1894 = vunpack.c.l.b16 %v1604
    %v1895 = vunpack.c.h.b16 %v1604
    %v1896 = vunpack.c.l.b16 %v1605
    %v1897 = vunpack.c.h.b16 %v1605
    %v1898 = vunpack.c.l.b16 %v1606
    %v1899 = vunpack.c.h.b16 %v1606
    %v1900 = vunpack.c.l.b16 %v1607
    %v1901 = vunpack.c.h.b16 %v1607
    %v1902 = vunpack.c.l.b16 %v1608
    %v1903 = vunpack.c.h.b16 %v1608
    %v1904 = vunpack.c.l.b16 %v1609
    %v1905 = vunpack.c.h.b16 %v1609
    %v1906 = vunpack.c.l.b16 %v1610
    %v1907 = vunpack.c.h.b16 %v1610
    %v1908 = vunpack.c.l.b16 %v1611
    %v1909 = vunpack.c.h.b16 %v1611
    %v1910 = vunpack.c.l.b16 %v1612
    %v1911 = vunpack.c.h.b16 %v1612
    %v1912 = vunpack.c.l.b16 %v1613
    %v1913 = vunpack.c.h.b16 %v1613
    %v1914 = vunpack.c.l.b16 %v1614
    %v1915 = vunpack.c.h.b16 %v1614
    %v1916 = vunpack.c.l.b16 %v1615
    %v1917 = vunpack.c.h.b16 %v1615
    %v1918 = vunpack.c.l.b16 %v1616
    %v1919 = vunpack.c.h.b16 %v1616
    %v1920 = vunpack.c.l.b16 %v1617
    %v1921 = vunpack.c.h.b16 %v1617
    %v1922 = vunpack.c.l.b16 %v1618
    %v1923 = vunpack.c.h.b16 %v1618
    %v1924 = vunpack.c.l.b16 %v1619
    %v1925 = vunpack.c.h.b16 %v1619
    %v1926 = vunpack.c.l.b16 %v1620
    %v1927 = vunpack.c.h.b16 %v1620
    %v1928 = vunpack.c.l.b16 %v1621
    %v1929 = vunpack.c.h.b16 %v1621
    %v1930 = vunpack.c.l.b16 %v1622
    %v1931 = vunpack.c.h.b16 %v1622
    %v1932 = vunpack.c.l.b16 %v1623
    %v1933 = vunpack.c.h.b16 %v1623
    %v1934 = vunpack.c.l.b16 %v1624
    %v1935 = vunpack.c.h.b16 %v1624
    %v1936 = vunpack.c.l.b16 %v1625
    %v1937 = vunpack.c.h.b16 %v1625
    %v1938 = vunpack.c.l.b16 %v1626
    %v1939 = vunpack.c.h.b16 %v1626
    %v1940 = vunpack.c.l.b16 %v1627
    %v1941 = vunpack.c.h.b16 %v1627
    %v1942 = vunpack.c.l.b16 %v1628
    %v1943 = vunpack.c.h.b16 %v1628
    %v1944 = vunpack.c.l.b16 %v1629
    %v1945 = vunpack.c.h.b16 %v1629
    %v1946 = vunpack.c.l.b16 %v1630
    %v1947 = vunpack.c.h.b16 %v1630
    %v1948 = vunpack.c.l.b16 %v1631
    %v1949 = vunpack.c.h.b16 %v1631
    %v1950 = vunpack.c.l.b16 %v1632
    %v1951 = vunpack.c.h.b16 %v1632
    %v1952 = vunpack.c.l.b16 %v1633
    %v1953 = vunpack.c.h.b16 %v1633
    %v1954 = vunpack.c.l.b16 %v1634
    %v1955 = vunpack.c.h.b16 %v1634
    %v1956 = vunpack.c.l.b16 %v1635
    %v1957 = vunpack.c.h.b16 %v1635
    %v1958 = vunpack.c.l.b16 %v1636
    %v1959 = vunpack.c.h.b16 %v1636
    %v1960 = vunpack.c.l.b16 %v1637
    %v1961 = vunpack.c.h.b16 %v1637
    %v1962 = vunpack.c.l.b16 %v1638
    %v1963 = vunpack.c.h.b16 %v1638
    %v1964 = vunpack.c.l.b16 %v1639
    %v1965 = vunpack.c.h.b16 %v1639
    %v1966 = vunpack.c.l.b16 %v1640
    %v1967 = vunpack.c.h.b16 %v1640
    %v1968 = vunpack.c.l.b16 %v1641
    %v1969 = vunpack.c.h.b16 %v1641
    %v1970 = vunpack.c.l.b16 %v1642
    %v1971 = vunpack.c.h.b16 %v1642
    %v1972 = vunpack.c.l.b16 %v1643
    %v1973 = vunpack.c.h.b16 %v1643
    %v1974 = vunpack.c.l.b16 %v1644
    %v1975 = vunpack.c.h.b16 %v1644
    %v1976 = vunpack.c.l.b16 %v1645
    %v1977 = vunpack.c.h.b16 %v1645
    %v1978 = vunpack.c.l.b16 %v1646
    %v1979 = vunpack.c.h.b16 %v1646
    %v1980 = vunpack.c.l.b16 %v1647
    %v1981 = vunpack.c.h.b16 %v1647
    %v1982 = vunpack.c.l.b16 %v1648
    %v1983 = vunpack.c.h.b16 %v1648
    %v1984 = vunpack.c.l.b16 %v1649
    %v1985 = vunpack.c.h.b16 %v1649
    %v1986 = vunpack.c.l.b16 %v1650
    %v1987 = vunpack.c.h.b16 %v1650
    %v1988 = vunpack.c.l.b16 %v1651
    %v1989 = vunpack.c.h.b16 %v1651
    %v1990 = vunpack.c.l.b16 %v1652
    %v1991 = vunpack.c.h.b16 %v1652
    %v1992 = vunpack.c.l.b16 %v1653
    %v1993 = vunpack.c.h.b16 %v1653
    %v1994 = vunpack.c.l.b16 %v1654
    %v1995 = vunpack.c.h.b16 %v1654
    %v1996 = vunpack.c.l.b16 %v1655
    %v1997 = vunpack.c.h.b16 %v1655
    %v1998 = vunpack.c.l.b16 %v1656
    %v1999 = vunpack.c.h.b16 %v1656
    %v2000 = vunpack.c.l.b16 %v1657
    %v2001 = vunpack.c.h.b16 %v1657
    %v2002 = vunpack.c.l.b16 %v1658
    %v2003 = vunpack.c.h.b16 %v1658
    %v2004 = vunpack.c.l.b16 %v1659
    %v2005 = vunpack.c.h.b16 %v1659
    %v2006 = vunpack.c.l.b16 %v1660
    %v2007 = vunpack.c.h.b16 %v1660
    %v2008 = vunpack.c.l.b16 %v1661
    %v2009 = vunpack.c.h.b16 %v1661
    %v2010 = vunpack.c.l.b16 %v1662
    %v2011 = vunpack.c.h.b16 %v1662
    %v2012 = vunpack.c.l.b16 %v1663
    %v2013 = vunpack.c.h.b16 %v1663
    %v2014 = vunpack.c.l.b16 %v1664
    %v2015 = vunpack.c.h.b16 %v1664
    %v2016 = vunpack.c.l.b16 %v1665
    %v2017 = vunpack.c.h.b16 %v1665
    %v2018 = vunpack.c.l.b16 %v1666
    %v2019 = vunpack.c.h.b16 %v1666
    %v2020 = vunpack.c.l.b16 %v1667
    %v2021 = vunpack.c.h.b16 %v1667
    %v2022 = vunpack.c.l.b16 %v1668
    %v2023 = vunpack.c.h.b16 %v1668
    %v2024 = vunpack.c.l.b16 %v1669
    %v2025 = vunpack.c.h.b16 %v1669
    %v2026 = vunpack.c.l.b16 %v1670
    %v2027 = vunpack.c.h.b16 %v1670
    %v2028 = vunpack.c.l.b16 %v1671
    %v2029 = vunpack.c.h.b16 %v1671
    %v2030 = vunpack.c.l.b16 %v1672
    %v2031 = vunpack.c.h.b16 %v1672
    %v2032 = vunpack.c.l.b16 %v1673
    %v2033 = vunpack.c.h.b16 %v1673
    %v2034 = vunpack.c.l.b16 %v1674
    %v2035 = vunpack.c.h.b16 %v1674
    %v2036 = vunpack.c.l.b16 %v1675
    %v2037 = vunpack.c.h.b16 %v1675
    %v2038 = vunpack.c.l.b16 %v1676
    %v2039 = vunpack.c.h.b16 %v1676
    %v2040 = vunpack.c.l.b16 %v1677
    %v2041 = vunpack.c.h.b16 %v1677
    %v2042 = vunpack.c.l.b16 %v1678
    %v2043 = vunpack.c.h.b16 %v1678
    %v2044 = vunpack.c.l.b16 %v1679
    %v2045 = vunpack.c.h.b16 %v1679
    %v2046 = vunpack.c.l.b16 %v1680
    %v2047 = vunpack.c.h.b16 %v1680
    %v2048 = vunpack.c.l.b16 %v1681
    %v2049 = vunpack.c.h.b16 %v1681
    %v2050 = vunpack.c.l.b16 %v1682
    %v2051 = vunpack.c.h.b16 %v1682
    %v2052 = vunpack.c.l.b16 %v1683
    %v2053 = vunpack.c.h.b16 %v1683
    %v2054 = vunpack.c.l.b16 %v1684
    %v2055 = vunpack.c.h.b16 %v1684
    %v2056 = vunpack.c.l.b16 %v1685
    %v2057 = vunpack.c.h.b16 %v1685
    %v2058 = vunpack.c.l.b16 %v1686
    %v2059 = vunpack.c.h.b16 %v1686
    %v2060 = vunpack.c.l.b16 %v1687
    %v2061 = vunpack.c.h.b16 %v1687
    %v2062 = vunpack.c.l.b16 %v1688
    %v2063 = vunpack.c.h.b16 %v1688
    %v2064 = vunpack.c.l.b16 %v1689
    %v2065 = vunpack.c.h.b16 %v1689
    %v2066 = vunpack.c.l.b16 %v1690
    %v2067 = vunpack.c.h.b16 %v1690
    %v2068 = vunpack.c.l.b16 %v1691
    %v2069 = vunpack.c.h.b16 %v1691
    %v2070 = vunpack.c.l.b16 %v1692
    %v2071 = vunpack.c.h.b16 %v1692
    %v2072 = vunpack.c.l.b16 %v1693
    %v2073 = vunpack.c.h.b16 %v1693
    %v2074 = vunpack.c.l.b16 %v1694
    %v2075 = vunpack.c.h.b16 %v1694
    %v2076 = vunpack.c.l.b16 %v1695
    %v2077 = vunpack.c.h.b16 %v1695
    %v2078 = vunpack.c.l.b16 %v1696
    %v2079 = vunpack.c.h.b16 %v1696
    %v2080 = vunpack.c.l.b16 %v1697
    %v2081 = vunpack.c.h.b16 %v1697
    %v2082 = vunpack.c.l.b16 %v1698
    %v2083 = vunpack.c.h.b16 %v1698
    %v2084 = vunpack.c.l.b16 %v1699
    %v2085 = vunpack.c.h.b16 %v1699
    %v2086 = vunpack.c.l.b16 %v1700
    %v2087 = vunpack.c.h.b16 %v1700
    %v2088 = vunpack.c.l.b16 %v1701
    %v2089 = vunpack.c.h.b16 %v1701
    %v2090 = vunpack.c.l.b16 %v1702
    %v2091 = vunpack.c.h.b16 %v1702
    %v2092 = vunpack.c.l.b16 %v1703
    %v2093 = vunpack.c.h.b16 %v1703
    %v2094 = vunpack.c.l.b16 %v1704
    %v2095 = vunpack.c.h.b16 %v1704
    %v2096 = vunpack.c.l.b16 %v1705
    %v2097 = vunpack.c.h.b16 %v1705
    %v2098 = vunpack.c.l.b16 %v1706
    %v2099 = vunpack.c.h.b16 %v1706
    %v2100 = vunpack.c.l.b16 %v1707
    %v2101 = vunpack.c.h.b16 %v1707
    %v2102 = vunpack.c.l.b16 %v1708
    %v2103 = vunpack.c.h.b16 %v1708
    %v2104 = vunpack.c.l.b16 %v1709
    %v2105 = vunpack.c.h.b16 %v1709
    %v2106 = vunpack.c.l.b16 %v1710
    %v2107 = vunpack.c.h.b16 %v1710
    %v2108 = vunpack.c.l.b16 %v1711
    %v2109 = vunpack.c.h.b16 %v1711
    %v2110 = vunpack.c.l.b16 %v1712
    %v2111 = vunpack.c.h.b16 %v1712
    %v2112 = vunpack.c.l.b16 %v1713
    %v2113 = vunpack.c.h.b16 %v1713
    %v2114 = vunpack.c.l.b16 %v1714
    %v2115 = vunpack.c.h.b16 %v1714
    %v2116 = vunpack.c.l.b16 %v1715
    %v2117 = vunpack.c.h.b16 %v1715
    %v2118 = vpack.c.b16 %v1870, %v1862
    %v2119 = vpack.c.b16 %v1871, %v1863
    %v2120 = vpack.c.b16 %v1872, %v1864
    %v2121 = vpack.c.b16 %v1873, %v1865
    %v2122 = vpack.c.b16 %v1874, %v1866
    %v2123 = vpack.c.b16 %v1875, %v1867
    %v2124 = vpack.c.b16 %v1876, %v1868
    %v2125 = vpack.c.b16 %v1877, %v1869
    %v2126 = vpack.c.b16 %v1886, %v1878
    %v2127 = vpack.c.b16 %v1887, %v1879
    %v2128 = vpack.c.b16 %v1888, %v1880
    %v2129 = vpack.c.b16 %v1889, %v1881
    %v2130 = vpack.c.b16 %v1890, %v1882
    %v2131 = vpack.c.b16 %v1891, %v1883
    %v2132 = vpack.c.b16 %v1892, %v1884
    %v2133 = vpack.c.b16 %v1893, %v1885
    %v2134 = vpack.c.b16 %v1902, %v1894
    %v2135 = vpack.c.b16 %v1903, %v1895
    %v2136 = vpack.c.b16 %v1904, %v1896
    %v2137 = vpack.c.b16 %v1905, %v1897
    %v2138 = vpack.c.b16 %v1906, %v1898
    %v2139 = vpack.c.b16 %v1907, %v1899
    %v2140 = vpack.c.b16 %v1908, %v1900
    %v2141 = vpack.c.b16 %v1909, %v1901
    %v2142 = vpack.c.b16 %v1918, %v1910
    %v2143 = vpack.c.b16 %v1919, %v1911
    %v2144 = vpack.c.b16 %v1920, %v1912
    %v2145 = vpack.c.b16 %v1921, %v1913
    %v2146 = vpack.c.b16 %v1922, %v1914
    %v2147 = vpack.c.b16 %v1923, %v1915
    %v2148 = vpack.c.b16 %v1924, %v1916
    %v2149 = vpack.c.b16 %v1925, %v1917
    %v2150 = vpack.c.b16 %v1934, %v1926
    %v2151 = vpack.c.b16 %v1935, %v1927
    %v2152 = vpack.c.b16 %v1936, %v1928
    %v2153 = vpack.c.b16 %v1937, %v1929
    %v2154 = vpack.c.b16 %v1938, %v1930
    %v2155 = vpack.c.b16 %v1939, %v1931
    %v2156 = vpack.c.b16 %v1940, %v1932
    %v2157 = vpack.c.b16 %v1941, %v1933
    %v2158 = vpack.c.b16 %v1950, %v1942
    %v2159 = vpack.c.b16 %v1951, %v1943
    %v2160 = vpack.c.b16 %v1952, %v1944
    %v2161 = vpack.c.b16 %v1953, %v1945
    %v2162 = vpack.c.b16 %v1954, %v1946
    %v2163 = vpack.c.b16 %v1955, %v1947
    %v2164 = vpack.c.b16 %v1956, %v1948
    %v2165 = vpack.c.b16 %v1957, %v1949
    %v2166 = vpack.c.b16 %v1966, %v1958
    %v2167 = vpack.c.b16 %v1967, %v1959
    %v2168 = vpack.c.b16 %v1968, %v1960
    %v2169 = vpack.c.b16 %v1969, %v1961
    %v2170 = vpack.c.b16 %v1970, %v1962
    %v2171 = vpack.c.b16 %v1971, %v1963
    %v2172 = vpack.c.b16 %v1972, %v1964
    %v2173 = vpack.c.b16 %v1973, %v1965
    %v2174 = vpack.c.b16 %v1982, %v1974
    %v2175 = vpack.c.b16 %v1983, %v1975
    %v2176 = vpack.c.b16 %v1984, %v1976
    %v2177 = vpack.c.b16 %v1985, %v1977
    %v2178 = vpack.c.b16 %v1986, %v1978
    %v2179 = vpack.c.b16 %v1987, %v1979
    %v2180 = vpack.c.b16 %v1988, %v1980
    %v2181 = vpack.c.b16 %v1989, %v1981
    %v2182 = vpack.c.b16 %v1998, %v1990
    %v2183 = vpack.c.b16 %v1999, %v1991
    %v2184 = vpack.c.b16 %v2000, %v1992
    %v2185 = vpack.c.b16 %v2001, %v1993
    %v2186 = vpack.c.b16 %v2002, %v1994
    %v2187 = vpack.c.b16 %v2003, %v1995
    %v2188 = vpack.c.b16 %v2004, %v1996
    %v2189 = vpack.c.b16 %v2005, %v1997
    %v2190 = vpack.c.b16 %v2014, %v2006
    %v2191 = vpack.c.b16 %v2015, %v2007
    %v2192 = vpack.c.b16 %v2016, %v2008
    %v2193 = vpack.c.b16 %v2017, %v2009
    %v2194 = vpack.c.b16 %v2018, %v2010
    %v2195 = vpack.c.b16 %v2019, %v2011
    %v2196 = vpack.c.b16 %v2020, %v2012
    %v2197 = vpack.c.b16 %v2021, %v2013
    %v2198 = vpack.c.b16 %v2030, %v2022
    %v2199 = vpack.c.b16 %v2031, %v2023
    %v2200 = vpack.c.b16 %v2032, %v2024
    %v2201 = vpack.c.b16 %v2033, %v2025
    %v2202 = vpack.c.b16 %v2034, %v2026
    %v2203 = vpack.c.b16 %v2035, %v2027
    %v2204 = vpack.c.b16 %v2036, %v2028
    %v2205 = vpack.c.b16 %v2037, %v2029
    %v2206 = vpack.c.b16 %v2046, %v2038
    %v2207 = vpack.c.b16 %v2047, %v2039
    %v2208 = vpack.c.b16 %v2048, %v2040
    %v2209 = vpack.c.b16 %v2049, %v2041
    %v2210 = vpack.c.b16 %v2050, %v2042
    %v2211 = vpack.c.b16 %v2051, %v2043
    %v2212 = vpack.c.b16 %v2052, %v2044
    %v2213 = vpack.c.b16 %v2053, %v2045
    %v2214 = vpack.c.b16 %v2062, %v2054
    %v2215 = vpack.c.b16 %v2063, %v2055
    %v2216 = vpack.c.b16 %v2064, %v2056
    %v2217 = vpack.c.b16 %v2065, %v2057
    %v2218 = vpack.c.b16 %v2066, %v2058
    %v2219 = vpack.c.b16 %v2067, %v2059
    %v2220 = vpack.c.b16 %v2068, %v2060
    %v2221 = vpack.c.b16 %v2069, %v2061
    %v2222 = vpack.c.b16 %v2078, %v2070
    %v2223 = vpack.c.b16 %v2079, %v2071
    %v2224 = vpack.c.b16 %v2080, %v2072
    %v2225 = vpack.c.b16 %v2081, %v2073
    %v2226 = vpack.c.b16 %v2082, %v2074
    %v2227 = vpack.c.b16 %v2083, %v2075
    %v2228 = vpack.c.b16 %v2084, %v2076
    %v2229 = vpack.c.b16 %v2085, %v2077
    %v2230 = vpack.c.b16 %v2094, %v2086
    %v2231 = vpack.c.b16 %v2095, %v2087
    %v2232 = vpack.c.b16 %v2096, %v2088
    %v2233 = vpack.c.b16 %v2097, %v2089
    %v2234 = vpack.c.b16 %v2098, %v2090
    %v2235 = vpack.c.b16 %v2099, %v2091
    %v2236 = vpack.c.b16 %v2100, %v2092
    %v2237 = vpack.c.b16 %v2101, %v2093
    %v2238 = vpack.c.b16 %v2110, %v2102
    %v2239 = vpack.c.b16 %v2111, %v2103
    %v2240 = vpack.c.b16 %v2112, %v2104
    %v2241 = vpack.c.b16 %v2113, %v2105
    %v2242 = vpack.c.b16 %v2114, %v2106
    %v2243 = vpack.c.b16 %v2115, %v2107
    %v2244 = vpack.c.b16 %v2116, %v2108
    %v2245 = vpack.c.b16 %v2117, %v2109
    %2374 = vmatpush.bf16.msra.mxu0 %v2174
    %2375 = vmatpush.bf16.msra.mxu0 %v2166
    %2376 = vmatpush.bf16.msra.mxu0 %v2158
    %2377 = vmatpush.bf16.msra.mxu0 %v2150
    %2378 = vmatpush.bf16.msra.mxu0 %v2142
    %2379 = vmatpush.bf16.msra.mxu0 %v2134
    %2380 = vmatpush.bf16.msra.mxu0 %v2126
    %2381 = vmatpush.bf16.msra.mxu0 %v2118
    %2382 = vmatmul.bf16.gmra.mxu0 %v1586
    %v2383 = vpop.f32.mrf.mxu0
    %v2384 = vadd.f32 %v1718, %v2383
    %v2385 = vpop.f32.mrf.mxu0
    %2386 = vdwg.mxu0
    %2387 = vmatpush.bf16.msra.mxu0 %v2238
    %2388 = vmatpush.bf16.msra.mxu0 %v2230
    %2389 = vmatpush.bf16.msra.mxu0 %v2222
    %2390 = vmatpush.bf16.msra.mxu0 %v2214
    %2391 = vmatpush.bf16.msra.mxu0 %v2206
    %2392 = vmatpush.bf16.msra.mxu0 %v2198
    %2393 = vmatpush.bf16.msra.mxu0 %v2190
    %2394 = vmatpush.bf16.msra.mxu0 %v2182
    %2395 = vmatmul.bf16.gmra.mxu0 %v1587
    %v2396 = vpop.f32.mrf.mxu0
    %v2397 = vadd.f32 %v2384, %v2396
    %v2398 = vpop.f32.mrf.mxu0
    %2399 = vdwg.mxu0
    %2400 = vmatpush.bf16.msra.mxu0 %v2175
    %2401 = vmatpush.bf16.msra.mxu0 %v2167
    %2402 = vmatpush.bf16.msra.mxu0 %v2159
    %2403 = vmatpush.bf16.msra.mxu0 %v2151
    %2404 = vmatpush.bf16.msra.mxu0 %v2143
    %2405 = vmatpush.bf16.msra.mxu0 %v2135
    %2406 = vmatpush.bf16.msra.mxu0 %v2127
    %2407 = vmatpush.bf16.msra.mxu0 %v2119
    %2408 = vmatmul.bf16.gmra.mxu0 %v1586
    %v2409 = vpop.f32.mrf.mxu0
    %v2410 = vadd.f32 %v1719, %v2409
    %v2411 = vpop.f32.mrf.mxu0
    %2412 = vdwg.mxu0
    %2413 = vmatpush.bf16.msra.mxu0 %v2239
    %2414 = vmatpush.bf16.msra.mxu0 %v2231
    %2415 = vmatpush.bf16.msra.mxu0 %v2223
    %2416 = vmatpush.bf16.msra.mxu0 %v2215
    %2417 = vmatpush.bf16.msra.mxu0 %v2207
    %2418 = vmatpush.bf16.msra.mxu0 %v2199
    %2419 = vmatpush.bf16.msra.mxu0 %v2191
    %2420 = vmatpush.bf16.msra.mxu0 %v2183
    %2421 = vmatmul.bf16.gmra.mxu0 %v1587
    %v2422 = vpop.f32.mrf.mxu0
    %v2423 = vadd.f32 %v2410, %v2422
    %v2424 = vpop.f32.mrf.mxu0
    %2425 = vdwg.mxu0
    %2426 = vmatpush.bf16.msra.mxu0 %v2176
    %2427 = vmatpush.bf16.msra.mxu0 %v2168
    %2428 = vmatpush.bf16.msra.mxu0 %v2160
    %2429 = vmatpush.bf16.msra.mxu0 %v2152
    %2430 = vmatpush.bf16.msra.mxu0 %v2144
    %2431 = vmatpush.bf16.msra.mxu0 %v2136
    %2432 = vmatpush.bf16.msra.mxu0 %v2128
    %2433 = vmatpush.bf16.msra.mxu0 %v2120
    %2434 = vmatmul.bf16.gmra.mxu0 %v1586
    %v2435 = vpop.f32.mrf.mxu0
    %v2436 = vadd.f32 %v1720, %v2435
    %v2437 = vpop.f32.mrf.mxu0
    %2438 = vdwg.mxu0
    %2439 = vmatpush.bf16.msra.mxu0 %v2240
    %2440 = vmatpush.bf16.msra.mxu0 %v2232
    %2441 = vmatpush.bf16.msra.mxu0 %v2224
    %2442 = vmatpush.bf16.msra.mxu0 %v2216
    %2443 = vmatpush.bf16.msra.mxu0 %v2208
    %2444 = vmatpush.bf16.msra.mxu0 %v2200
    %2445 = vmatpush.bf16.msra.mxu0 %v2192
    %2446 = vmatpush.bf16.msra.mxu0 %v2184
    %2447 = vmatmul.bf16.gmra.mxu0 %v1587
    %v2448 = vpop.f32.mrf.mxu0
    %v2449 = vadd.f32 %v2436, %v2448
    %v2450 = vpop.f32.mrf.mxu0
    %2451 = vdwg.mxu0
    %2452 = vmatpush.bf16.msra.mxu0 %v2177
    %2453 = vmatpush.bf16.msra.mxu0 %v2169
    %2454 = vmatpush.bf16.msra.mxu0 %v2161
    %2455 = vmatpush.bf16.msra.mxu0 %v2153
    %2456 = vmatpush.bf16.msra.mxu0 %v2145
    %2457 = vmatpush.bf16.msra.mxu0 %v2137
    %2458 = vmatpush.bf16.msra.mxu0 %v2129
    %2459 = vmatpush.bf16.msra.mxu0 %v2121
    %2460 = vmatmul.bf16.gmra.mxu0 %v1586
    %v2461 = vpop.f32.mrf.mxu0
    %v2462 = vadd.f32 %v1721, %v2461
    %v2463 = vpop.f32.mrf.mxu0
    %2464 = vdwg.mxu0
    %2465 = vmatpush.bf16.msra.mxu0 %v2241
    %2466 = vmatpush.bf16.msra.mxu0 %v2233
    %2467 = vmatpush.bf16.msra.mxu0 %v2225
    %2468 = vmatpush.bf16.msra.mxu0 %v2217
    %2469 = vmatpush.bf16.msra.mxu0 %v2209
    %2470 = vmatpush.bf16.msra.mxu0 %v2201
    %2471 = vmatpush.bf16.msra.mxu0 %v2193
    %2472 = vmatpush.bf16.msra.mxu0 %v2185
    %2473 = vmatmul.bf16.gmra.mxu0 %v1587
    %v2474 = vpop.f32.mrf.mxu0
    %v2475 = vadd.f32 %v2462, %v2474
    %v2476 = vpop.f32.mrf.mxu0
    %2477 = vdwg.mxu0
    %2478 = vmatpush.bf16.msra.mxu0 %v2178
    %2479 = vmatpush.bf16.msra.mxu0 %v2170
    %2480 = vmatpush.bf16.msra.mxu0 %v2162
    %2481 = vmatpush.bf16.msra.mxu0 %v2154
    %2482 = vmatpush.bf16.msra.mxu0 %v2146
    %2483 = vmatpush.bf16.msra.mxu0 %v2138
    %2484 = vmatpush.bf16.msra.mxu0 %v2130
    %2485 = vmatpush.bf16.msra.mxu0 %v2122
    %2486 = vmatmul.bf16.gmra.mxu0 %v1586
    %v2487 = vpop.f32.mrf.mxu0
    %v2488 = vadd.f32 %v1722, %v2487
    %v2489 = vpop.f32.mrf.mxu0
    %2490 = vdwg.mxu0
    %2491 = vmatpush.bf16.msra.mxu0 %v2242
    %2492 = vmatpush.bf16.msra.mxu0 %v2234
    %2493 = vmatpush.bf16.msra.mxu0 %v2226
    %2494 = vmatpush.bf16.msra.mxu0 %v2218
    %2495 = vmatpush.bf16.msra.mxu0 %v2210
    %2496 = vmatpush.bf16.msra.mxu0 %v2202
    %2497 = vmatpush.bf16.msra.mxu0 %v2194
    %2498 = vmatpush.bf16.msra.mxu0 %v2186
    %2499 = vmatmul.bf16.gmra.mxu0 %v1587
    %v2500 = vpop.f32.mrf.mxu0
    %v2501 = vadd.f32 %v2488, %v2500
    %v2502 = vpop.f32.mrf.mxu0
    %2503 = vdwg.mxu0
    %2504 = vmatpush.bf16.msra.mxu0 %v2179
    %2505 = vmatpush.bf16.msra.mxu0 %v2171
    %2506 = vmatpush.bf16.msra.mxu0 %v2163
    %2507 = vmatpush.bf16.msra.mxu0 %v2155
    %2508 = vmatpush.bf16.msra.mxu0 %v2147
    %2509 = vmatpush.bf16.msra.mxu0 %v2139
    %2510 = vmatpush.bf16.msra.mxu0 %v2131
    %2511 = vmatpush.bf16.msra.mxu0 %v2123
    %2512 = vmatmul.bf16.gmra.mxu0 %v1586
    %v2513 = vpop.f32.mrf.mxu0
    %v2514 = vadd.f32 %v1723, %v2513
    %v2515 = vpop.f32.mrf.mxu0
    %2516 = vdwg.mxu0
    %2517 = vmatpush.bf16.msra.mxu0 %v2243
    %2518 = vmatpush.bf16.msra.mxu0 %v2235
    %2519 = vmatpush.bf16.msra.mxu0 %v2227
    %2520 = vmatpush.bf16.msra.mxu0 %v2219
    %2521 = vmatpush.bf16.msra.mxu0 %v2211
    %2522 = vmatpush.bf16.msra.mxu0 %v2203
    %2523 = vmatpush.bf16.msra.mxu0 %v2195
    %2524 = vmatpush.bf16.msra.mxu0 %v2187
    %2525 = vmatmul.bf16.gmra.mxu0 %v1587
    %v2526 = vpop.f32.mrf.mxu0
    %v2527 = vadd.f32 %v2514, %v2526
    %v2528 = vpop.f32.mrf.mxu0
    %2529 = vdwg.mxu0
    %2530 = vmatpush.bf16.msra.mxu0 %v2180
    %2531 = vmatpush.bf16.msra.mxu0 %v2172
    %2532 = vmatpush.bf16.msra.mxu0 %v2164
    %2533 = vmatpush.bf16.msra.mxu0 %v2156
    %2534 = vmatpush.bf16.msra.mxu0 %v2148
    %2535 = vmatpush.bf16.msra.mxu0 %v2140
    %2536 = vmatpush.bf16.msra.mxu0 %v2132
    %2537 = vmatpush.bf16.msra.mxu0 %v2124
    %2538 = vmatmul.bf16.gmra.mxu0 %v1586
    %v2539 = vpop.f32.mrf.mxu0
    %v2540 = vadd.f32 %v1724, %v2539
    %v2541 = vpop.f32.mrf.mxu0
    %2542 = vdwg.mxu0
    %2543 = vmatpush.bf16.msra.mxu0 %v2244
    %2544 = vmatpush.bf16.msra.mxu0 %v2236
    %2545 = vmatpush.bf16.msra.mxu0 %v2228
    %2546 = vmatpush.bf16.msra.mxu0 %v2220
    %2547 = vmatpush.bf16.msra.mxu0 %v2212
    %2548 = vmatpush.bf16.msra.mxu0 %v2204
    %2549 = vmatpush.bf16.msra.mxu0 %v2196
    %2550 = vmatpush.bf16.msra.mxu0 %v2188
    %2551 = vmatmul.bf16.gmra.mxu0 %v1587
    %v2552 = vpop.f32.mrf.mxu0
    %v2553 = vadd.f32 %v2540, %v2552
    %v2554 = vpop.f32.mrf.mxu0
    %2555 = vdwg.mxu0
    %2556 = vmatpush.bf16.msra.mxu0 %v2181
    %2557 = vmatpush.bf16.msra.mxu0 %v2173
    %2558 = vmatpush.bf16.msra.mxu0 %v2165
    %2559 = vmatpush.bf16.msra.mxu0 %v2157
    %2560 = vmatpush.bf16.msra.mxu0 %v2149
    %2561 = vmatpush.bf16.msra.mxu0 %v2141
    %2562 = vmatpush.bf16.msra.mxu0 %v2133
    %2563 = vmatpush.bf16.msra.mxu0 %v2125
    %2564 = vmatmul.bf16.gmra.mxu0 %v1586
    %v2565 = vpop.f32.mrf.mxu0
    %v2566 = vadd.f32 %v1725, %v2565
    %v2567 = vpop.f32.mrf.mxu0
    %2568 = vdwg.mxu0
    %2569 = vmatpush.bf16.msra.mxu0 %v2245
    %2570 = vmatpush.bf16.msra.mxu0 %v2237
    %2571 = vmatpush.bf16.msra.mxu0 %v2229
    %2572 = vmatpush.bf16.msra.mxu0 %v2221
    %2573 = vmatpush.bf16.msra.mxu0 %v2213
    %2574 = vmatpush.bf16.msra.mxu0 %v2205
    %2575 = vmatpush.bf16.msra.mxu0 %v2197
    %2576 = vmatpush.bf16.msra.mxu0 %v2189
    %2577 = vmatmul.bf16.gmra.mxu0 %v1587
    %v2578 = vpop.f32.mrf.mxu0
    %v2579 = vadd.f32 %v2566, %v2578
    %v2580 = vpop.f32.mrf.mxu0
    %2581 = vdwg.mxu0
    %v2582 = vpack.c.bf16 %v2423, %v2397
    %v2583 = vpack.c.bf16 %v2475, %v2449
    %v2584 = vpack.c.bf16 %v2527, %v2501
    %v2585 = vpack.c.bf16 %v2579, %v2553
    %2586 = vst [vmem:[%s13] sm:$0xff] %v2582
    %2587 = vst [vmem:[%s13 + $0x8] sm:$0xff] %v2583
    %2588 = vst [vmem:[%s13 + $0x10] sm:$0xff] %v2584
    %2589 = vst [vmem:[%s13 + $0x18] sm:$0xff] %v2585
    // Predicated region
    $region70: #{mlpae_forward.1} parent=1 // pred_check
      _
    $region71: #{mlpae_forward.1} parent=1 // pred_check_branch
      %2591 = sbr.rel (0) target = $region73
    $region72: #{mlpae_forward.1} parent=1 // pred_region
      _
    $region73: #{mlpae_forward.1} parent=1 // pred_fallthru
      _
    // Predicated region
    $region74: #{mlpae_forward.1} parent=1 // pred_check
      _
    $region75: #{mlpae_forward.1} parent=1 // pred_check_branch
      %2593 = sbr.rel (0) target = $region77
    $region76: #{mlpae_forward.1} parent=1 // pred_region
      _
    $region77: #{mlpae_forward.1} parent=1 // pred_fallthru
      _
    %2594 = vsyncpa [#allocation3], 1
    %2595 = vsyncpa [#allocation5], 1
    %2596 = vsyncpa [#allocation8], 1

</llo_original>
